<compile_context>
chip_gen: v7x
topology: tpu7x:2x2x1
jax: 0.10.0
libtpu: 0.0.40
codegen_flags: <defaults>
</compile_context>

<pallas_src>
import functools

import jax
import jax.numpy as jnp
from jax.experimental import pallas as pl
from jax.experimental.pallas import tpu as pltpu

HIDDEN = 300            # PyTorch hidden_dim
HP = 384                # hidden padded to a multiple of 128 lanes
OUT_PAD = 128           # MXU output width of the fused l3/l6 projection
OUT_W = 8               # columns written back to HBM (q1 -> col 0, q2 -> col 1)
BLOCK_B_MAX = 1024      # batch tile (amortizes per-grid-step overhead)
VMEM_LIMIT_BYTES = 32 * 1024 * 1024


def _round_up(n, m):
    return (n + m - 1) // m * m


def _cdiv(a, b):
    return -(-a // b)


def _device_kind():
    try:
        return jax.devices()[0].device_kind.lower()
    except Exception:
        return ""


_KIND = _device_kind()
# bf16 VALU/EUP exists on v6e/v7x; keep the epilogue f32 on v5e and older.
_BF16_EPILOGUE_DEFAULT = ("v6" in _KIND) or ("v7" in _KIND)
# v7x has 2 TensorCores per chip; shard the batch grid axis across them.
_CORE_PARALLEL_DEFAULT = ("v7" in _KIND)


def _critic_kernel(xu_ref, w1_ref, w2_ref, b2_ref, w5_ref, b5_ref,
                   w36_ref, b36_ref, out_ref, *, bf16_epilogue):
    # Fused layers 1 & 4: one bf16 K=16 matmul; biases were folded into the
    # weight through the constant-1 input column, so no bias add here.
    h = jnp.dot(xu_ref[...], w1_ref[...], preferred_element_type=jnp.float32)
    if bf16_epilogue:
        h = jnp.maximum(h, 0.0).astype(jnp.bfloat16)      # (bm, 2*HP) bf16
        h1, h2 = h[:, :HP], h[:, HP:]
    else:
        h = jnp.maximum(h, 0.0)                           # (bm, 2*HP) f32
        h1 = h[:, :HP].astype(jnp.bfloat16)
        h2 = h[:, HP:].astype(jnp.bfloat16)

    # Layers 2 & 5 on the two independent halves (bf16 MXU, f32 accumulate).
    g1 = jnp.dot(h1, w2_ref[...], preferred_element_type=jnp.float32)
    g2 = jnp.dot(h2, w5_ref[...], preferred_element_type=jnp.float32)
    if bf16_epilogue:
        b2 = b2_ref[...].astype(jnp.bfloat16)
        b5 = b5_ref[...].astype(jnp.bfloat16)
        g1 = jnp.maximum(g1.astype(jnp.bfloat16) + b2, 0.0)
        g2 = jnp.maximum(g2.astype(jnp.bfloat16) + b5, 0.0)
    else:
        g1 = jnp.maximum(g1 + b2_ref[...], 0.0).astype(jnp.bfloat16)
        g2 = jnp.maximum(g2 + b5_ref[...], 0.0).astype(jnp.bfloat16)

    # Fused layers 3 & 6: one stacked (2*HP, 128) bf16 matmul (lane-aligned
    # concat is just vreg placement); q1 in lane 0, q2 in lane 1.
    g = jnp.concatenate([g1, g2], axis=-1)                # (bm, 2*HP) bf16
    q = jnp.dot(g, w36_ref[...], preferred_element_type=jnp.float32) + b36_ref[...]
    out_ref[...] = q[:, :OUT_W].astype(out_ref.dtype)     # narrow HBM writeback


@functools.partial(jax.jit,
                   static_argnames=("block_b", "bf16_epilogue", "core_parallel"))
def _forward_impl(x, sg, u, kparams, *, block_b, bf16_epilogue, core_parallel):
    B = x.shape[0]
    if B == 0:
        z = jnp.zeros((0, 1), jnp.float32)
        return z, z

    in_dim = x.shape[1] + sg.shape[1] + u.shape[1]
    k_p = kparams["w1"].shape[0]

    # Pack [x | sg | u | 1 | 0-pad] -> (B, k_p) bf16 once, host-side.
    parts = [x, sg, u, jnp.ones((B, 1), jnp.float32)]
    pad_cols = k_p - (in_dim + 1)
    if pad_cols:
        parts.append(jnp.zeros((B, pad_cols), jnp.float32))
    xu = jnp.concatenate(parts, axis=1).astype(jnp.bfloat16)

    # Batch tile: as large as block_b allows, rounded to the sublane multiple,
    # and chosen to minimize padding when B is just above a tile boundary.
    n_tiles = _cdiv(B, block_b)
    bm = min(_round_up(_cdiv(B, n_tiles), 8), _round_up(block_b, 8))
    b_pad = _round_up(B, bm)
    if b_pad != B:
        xu = jnp.pad(xu, ((0, b_pad - B), (0, 0)))
    grid = (b_pad // bm,)

    if core_parallel and grid[0] >= 2:
        dim_sem = (pltpu.CORE_PARALLEL,)   # v7x: shard batch tiles over 2 TCs
    else:
        dim_sem = ("parallel",)

    weight_names = ("w1", "w2", "b2", "w5", "b5", "w36", "b36")
    weights = tuple(kparams[n] for n in weight_names)

    # NOTE: the constant index_map keeps all weights VMEM-resident across the
    # grid; they could additionally be single-buffered (pipeline_mode=
    # pl.Buffered(1)) to save ~0.8 MiB of VMEM, left at the default here.
    in_specs = ([pl.BlockSpec((bm, k_p), lambda i: (i, 0))]
                + [pl.BlockSpec(w.shape, lambda i: (0, 0)) for w in weights])

    out = pl.pallas_call(
        functools.partial(_critic_kernel, bf16_epilogue=bf16_epilogue),
        grid=grid,
        out_shape=jax.ShapeDtypeStruct((b_pad, OUT_W), jnp.float32),
        in_specs=in_specs,
        out_specs=pl.BlockSpec((bm, OUT_W), lambda i: (i, 0)),
        compiler_params=pltpu.CompilerParams(
            dimension_semantics=dim_sem,
            vmem_limit_bytes=VMEM_LIMIT_BYTES),
    )(xu, *weights)

    q = out[:B]
    return q[:, 0:1], q[:, 1:2]


def controller_critic_forward(x, sg, u, kparams, *, block_b=BLOCK_B_MAX,
                              bf16_epilogue=None, core_parallel=None):
    """Equivalent of ControllerCritic.forward(x, sg, u) -> (q1, q2)."""
    if bf16_epilogue is None:
        bf16_epilogue = _BF16_EPILOGUE_DEFAULT
    if core_parallel is None:
        core_parallel = _CORE_PARALLEL_DEFAULT
    return _forward_impl(x, sg, u, kparams, block_b=block_b,
                         bf16_epilogue=bf16_epilogue,
                         core_parallel=core_parallel)


def init_params(state_dim, goal_dim, action_dim, hidden_dim=HIDDEN, seed=0):
    """PyTorch-equivalent f32 params; weights stored (in_features, out_features)."""
    in_dim = state_dim + goal_dim + action_dim
    key = jax.random.PRNGKey(seed)
    layer_dims = [
        (in_dim, hidden_dim),      # l1
        (hidden_dim, hidden_dim),  # l2
        (hidden_dim, 1),           # l3
        (in_dim, hidden_dim),      # l4
        (hidden_dim, hidden_dim),  # l5
        (hidden_dim, 1),           # l6
    ]
    params = {}
    for idx, (fan_in, fan_out) in enumerate(layer_dims, start=1):
        key, kw, kb = jax.random.split(key, 3)
        bound = 1.0 / jnp.sqrt(jnp.float32(fan_in))
        params[f"w{idx}"] = jax.random.uniform(
            kw, (fan_in, fan_out), jnp.float32, -bound, bound)
        params[f"b{idx}"] = jax.random.uniform(
            kb, (1, fan_out), jnp.float32, -bound, bound)
    return params


def pack_params(params, state_dim, goal_dim, action_dim, hidden_dim=HIDDEN):
    """Fuse / pad / cast PyTorch-layout params into the kernel-side layout."""
    H = hidden_dim
    HP2 = 2 * HP
    f32, bf16 = jnp.float32, jnp.bfloat16
    in_dim = state_dim + goal_dim + action_dim
    k_p = _round_up(in_dim + 1, 8)     # +1 for the folded-bias ones-column

    # Fused layer-1/4 weight; biases folded into row `in_dim` (ones column).
    w1 = jnp.zeros((k_p, HP2), f32)
    w1 = w1.at[:in_dim, :H].set(params["w1"])
    w1 = w1.at[:in_dim, HP:HP + H].set(params["w4"])
    w1 = w1.at[in_dim, :H].set(params["b1"][0])
    w1 = w1.at[in_dim, HP:HP + H].set(params["b4"][0])

    def pad_sq(w, b):
        wp = jnp.zeros((HP, HP), f32).at[:H, :H].set(w)
        bp = jnp.zeros((1, HP), f32).at[:, :H].set(b)
        return wp, bp

    w2p, b2p = pad_sq(params["w2"], params["b2"])
    w5p, b5p = pad_sq(params["w5"], params["b5"])

    # Fused layer-3/6: stacked (2*HP, 128) projection; q1 -> lane 0, q2 -> lane 1.
    w36 = jnp.zeros((HP2, OUT_PAD), f32)
    w36 = w36.at[:H, 0:1].set(params["w3"])
    w36 = w36.at[HP:HP + H, 1:2].set(params["w6"])
    b36 = jnp.zeros((1, OUT_PAD), f32)
    b36 = b36.at[:, 0:1].set(params["b3"]).at[:, 1:2].set(params["b6"])

    return {
        "w1": w1.astype(bf16),                       # (k_p, 2*HP)
        "w2": w2p.astype(bf16), "b2": b2p,           # (HP, HP), (1, HP)
        "w5": w5p.astype(bf16), "b5": b5p,
        "w36": w36.astype(bf16), "b36": b36,         # (2*HP, 128), (1, 128)
    }


def _reference_forward(x, sg, u, params):
    """Pure-JAX f32 reference matching the PyTorch module semantics."""
    xu = jnp.concatenate([x, sg, u], axis=1)
    h1 = jax.nn.relu(xu @ params["w1"] + params["b1"])
    h1 = jax.nn.relu(h1 @ params["w2"] + params["b2"])
    q1 = h1 @ params["w3"] + params["b3"]
    h2 = jax.nn.relu(xu @ params["w4"] + params["b4"])
    h2 = jax.nn.relu(h2 @ params["w5"] + params["b5"])
    q2 = h2 @ params["w6"] + params["b6"]
    return q1, q2


if __name__ == "__main__":
    # Small shapes consistent with the module: batch=4, state=8, goal=3, action=2.
    batch, state_dim, goal_dim, action_dim = 4, 8, 3, 2

    key = jax.random.PRNGKey(0)
    kx, kg, ku = jax.random.split(key, 3)
    x = jax.random.normal(kx, (batch, state_dim), jnp.float32)
    sg = jax.random.normal(kg, (batch, goal_dim), jnp.float32)
    u = jax.random.normal(ku, (batch, action_dim), jnp.float32)

    params = init_params(state_dim, goal_dim, action_dim, hidden_dim=HIDDEN, seed=0)
    kparams = pack_params(params, state_dim, goal_dim, action_dim, hidden_dim=HIDDEN)

    q1, q2 = controller_critic_forward(x, sg, u, kparams)
    jax.block_until_ready((q1, q2))

    r1, r2 = _reference_forward(x, sg, u, params)
    assert q1.shape == (batch, 1) and q2.shape == (batch, 1)
    # bf16 inputs / weights / hidden activations -> loosened tolerance vs f32 ref.
    assert jnp.allclose(q1, r1, atol=1e-1, rtol=1e-1), (q1, r1)
    assert jnp.allclose(q2, r2, atol=1e-1, rtol=1e-1), (q2, r2)

    print("KERNEL_OK")
</pallas_src>

<mosaic_0001>
module attributes {stable_mosaic.version = 11 : i64} {
  func.func @_critic_kernel(%arg0: i32, %arg1: memref<8x16xbf16, #tpu.memory_space<vmem>>, %arg2: memref<16x768xbf16, #tpu.memory_space<vmem>>, %arg3: memref<384x384xbf16, #tpu.memory_space<vmem>>, %arg4: memref<1x384xf32, #tpu.memory_space<vmem>>, %arg5: memref<384x384xbf16, #tpu.memory_space<vmem>>, %arg6: memref<1x384xf32, #tpu.memory_space<vmem>>, %arg7: memref<768x128xbf16, #tpu.memory_space<vmem>>, %arg8: memref<1x128xf32, #tpu.memory_space<vmem>>, %arg9: memref<8x8xf32, #tpu.memory_space<vmem>>) attributes {dimension_semantics = [#tpu.dimension_semantics<parallel>], iteration_bounds = array<i64: 1>, scalar_prefetch = 0 : i64, scratch_operands = 0 : i64, tpu.core_type = #tpu.core_type<tc>, window_params = [{transform_indices = @transform_0, window_bounds = array<i64: 8, 16>}, {pipeline_mode = #tpu.pipeline_mode<synchronous>, transform_indices = @transform_1, window_bounds = array<i64: 16, 768>}, {pipeline_mode = #tpu.pipeline_mode<synchronous>, transform_indices = @transform_2, window_bounds = array<i64: 384, 384>}, {pipeline_mode = #tpu.pipeline_mode<synchronous>, transform_indices = @transform_3, window_bounds = array<i64: 1, 384>}, {pipeline_mode = #tpu.pipeline_mode<synchronous>, transform_indices = @transform_4, window_bounds = array<i64: 384, 384>}, {pipeline_mode = #tpu.pipeline_mode<synchronous>, transform_indices = @transform_5, window_bounds = array<i64: 1, 384>}, {pipeline_mode = #tpu.pipeline_mode<synchronous>, transform_indices = @transform_6, window_bounds = array<i64: 768, 128>}, {pipeline_mode = #tpu.pipeline_mode<synchronous>, transform_indices = @transform_7, window_bounds = array<i64: 1, 128>}, {transform_indices = @transform_8, window_bounds = array<i64: 8, 8>}]} {
    %c0 = arith.constant 0 : index
    %c0_0 = arith.constant 0 : index
    %0 = vector.load %arg1[%c0, %c0_0] : memref<8x16xbf16, #tpu.memory_space<vmem>>, vector<8x16xbf16>
    %c0_1 = arith.constant 0 : index
    %c0_2 = arith.constant 0 : index
    %1 = vector.load %arg2[%c0_1, %c0_2] : memref<16x768xbf16, #tpu.memory_space<vmem>>, vector<16x768xbf16>
    %cst = arith.constant dense<0.000000e+00> : vector<8x768xf32>
    %2 = tpu.matmul %0, %1, %cst {dimension_numbers = #tpu.dot_dimension_numbers<[1], [0], [0], [1], [0, 0, 1, 1], [], []>} : vector<8x16xbf16>, vector<16x768xbf16>, vector<8x768xf32> -> vector<8x768xf32>
    %cst_3 = arith.constant 0.000000e+00 : f32
    %3 = vector.broadcast %cst_3 : f32 to vector<8x768xf32>
    %4 = arith.maximumf %2, %3 : vector<8x768xf32>
    %5 = vector.extract_strided_slice %4 {offsets = [0, 0], sizes = [8, 384], strides = [1, 1]} : vector<8x768xf32> to vector<8x384xf32>
    %6 = arith.truncf %5 : vector<8x384xf32> to vector<8x384xbf16>
    %7 = vector.extract_strided_slice %4 {offsets = [0, 384], sizes = [8, 384], strides = [1, 1]} : vector<8x768xf32> to vector<8x384xf32>
    %8 = arith.truncf %7 : vector<8x384xf32> to vector<8x384xbf16>
    %c0_4 = arith.constant 0 : index
    %c0_5 = arith.constant 0 : index
    %9 = vector.load %arg3[%c0_4, %c0_5] : memref<384x384xbf16, #tpu.memory_space<vmem>>, vector<384x384xbf16>
    %cst_6 = arith.constant dense<0.000000e+00> : vector<8x384xf32>
    %10 = tpu.matmul %6, %9, %cst_6 {dimension_numbers = #tpu.dot_dimension_numbers<[1], [0], [0], [1], [0, 0, 1, 1], [], []>} : vector<8x384xbf16>, vector<384x384xbf16>, vector<8x384xf32> -> vector<8x384xf32>
    %c0_7 = arith.constant 0 : index
    %c0_8 = arith.constant 0 : index
    %11 = vector.load %arg5[%c0_7, %c0_8] : memref<384x384xbf16, #tpu.memory_space<vmem>>, vector<384x384xbf16>
    %cst_9 = arith.constant dense<0.000000e+00> : vector<8x384xf32>
    %12 = tpu.matmul %8, %11, %cst_9 {dimension_numbers = #tpu.dot_dimension_numbers<[1], [0], [0], [1], [0, 0, 1, 1], [], []>} : vector<8x384xbf16>, vector<384x384xbf16>, vector<8x384xf32> -> vector<8x384xf32>
    %c0_10 = arith.constant 0 : index
    %c0_11 = arith.constant 0 : index
    %13 = vector.load %arg4[%c0_10, %c0_11] : memref<1x384xf32, #tpu.memory_space<vmem>>, vector<1x384xf32>
    %14 = vector.broadcast %13 : vector<1x384xf32> to vector<8x384xf32>
    %15 = arith.addf %10, %14 : vector<8x384xf32>
    %cst_12 = arith.constant 0.000000e+00 : f32
    %16 = vector.broadcast %cst_12 : f32 to vector<8x384xf32>
    %17 = arith.maximumf %15, %16 : vector<8x384xf32>
    %18 = arith.truncf %17 : vector<8x384xf32> to vector<8x384xbf16>
    %c0_13 = arith.constant 0 : index
    %c0_14 = arith.constant 0 : index
    %19 = vector.load %arg6[%c0_13, %c0_14] : memref<1x384xf32, #tpu.memory_space<vmem>>, vector<1x384xf32>
    %20 = vector.broadcast %19 : vector<1x384xf32> to vector<8x384xf32>
    %21 = arith.addf %12, %20 : vector<8x384xf32>
    %cst_15 = arith.constant 0.000000e+00 : f32
    %22 = vector.broadcast %cst_15 : f32 to vector<8x384xf32>
    %23 = arith.maximumf %21, %22 : vector<8x384xf32>
    %24 = arith.truncf %23 : vector<8x384xf32> to vector<8x384xbf16>
    %25 = tpu.concatenate %18, %24 in 1 : vector<8x384xbf16>, vector<8x384xbf16> -> vector<8x768xbf16>
    %c0_16 = arith.constant 0 : index
    %c0_17 = arith.constant 0 : index
    %26 = vector.load %arg7[%c0_16, %c0_17] : memref<768x128xbf16, #tpu.memory_space<vmem>>, vector<768x128xbf16>
    %cst_18 = arith.constant dense<0.000000e+00> : vector<8x128xf32>
    %27 = tpu.matmul %25, %26, %cst_18 {dimension_numbers = #tpu.dot_dimension_numbers<[1], [0], [0], [1], [0, 0, 1, 1], [], []>} : vector<8x768xbf16>, vector<768x128xbf16>, vector<8x128xf32> -> vector<8x128xf32>
    %c0_19 = arith.constant 0 : index
    %c0_20 = arith.constant 0 : index
    %28 = vector.load %arg8[%c0_19, %c0_20] : memref<1x128xf32, #tpu.memory_space<vmem>>, vector<1x128xf32>
    %29 = vector.broadcast %28 : vector<1x128xf32> to vector<8x128xf32>
    %30 = arith.addf %27, %29 : vector<8x128xf32>
    %31 = vector.extract_strided_slice %30 {offsets = [0, 0], sizes = [8, 8], strides = [1, 1]} : vector<8x128xf32> to vector<8x8xf32>
    %c0_21 = arith.constant 0 : index
    %c0_22 = arith.constant 0 : index
    %32 = vector.load %arg9[%c0_21, %c0_22] : memref<8x8xf32, #tpu.memory_space<vmem>>, vector<8x8xf32>
    tpu.vector_store %arg9[%c0_21, %c0_22], %31 {strides = array<i32>} : memref<8x8xf32, #tpu.memory_space<vmem>>, vector<8x8xf32>,
    return
  }
  func.func @transform_0(%arg0: i32) -> (i32, i32) {
    %c0_i32 = arith.constant 0 : i32
    %c0_i32_0 = arith.constant 0 : i32
    return %arg0, %c0_i32 : i32, i32
  }
  func.func @transform_1(%arg0: i32) -> (i32, i32) {
    %c0_i32 = arith.constant 0 : i32
    %c0_i32_0 = arith.constant 0 : i32
    %c0_i32_1 = arith.constant 0 : i32
    return %c0_i32, %c0_i32_0 : i32, i32
  }
  func.func @transform_2(%arg0: i32) -> (i32, i32) {
    %c0_i32 = arith.constant 0 : i32
    %c0_i32_0 = arith.constant 0 : i32
    %c0_i32_1 = arith.constant 0 : i32
    return %c0_i32, %c0_i32_0 : i32, i32
  }
  func.func @transform_3(%arg0: i32) -> (i32, i32) {
    %c0_i32 = arith.constant 0 : i32
    %c0_i32_0 = arith.constant 0 : i32
    %c0_i32_1 = arith.constant 0 : i32
    return %c0_i32, %c0_i32_0 : i32, i32
  }
  func.func @transform_4(%arg0: i32) -> (i32, i32) {
    %c0_i32 = arith.constant 0 : i32
    %c0_i32_0 = arith.constant 0 : i32
    %c0_i32_1 = arith.constant 0 : i32
    return %c0_i32, %c0_i32_0 : i32, i32
  }
  func.func @transform_5(%arg0: i32) -> (i32, i32) {
    %c0_i32 = arith.constant 0 : i32
    %c0_i32_0 = arith.constant 0 : i32
    %c0_i32_1 = arith.constant 0 : i32
    return %c0_i32, %c0_i32_0 : i32, i32
  }
  func.func @transform_6(%arg0: i32) -> (i32, i32) {
    %c0_i32 = arith.constant 0 : i32
    %c0_i32_0 = arith.constant 0 : i32
    %c0_i32_1 = arith.constant 0 : i32
    return %c0_i32, %c0_i32_0 : i32, i32
  }
  func.func @transform_7(%arg0: i32) -> (i32, i32) {
    %c0_i32 = arith.constant 0 : i32
    %c0_i32_0 = arith.constant 0 : i32
    %c0_i32_1 = arith.constant 0 : i32
    return %c0_i32, %c0_i32_0 : i32, i32
  }
  func.func @transform_8(%arg0: i32) -> (i32, i32) {
    %c0_i32 = arith.constant 0 : i32
    %c0_i32_0 = arith.constant 0 : i32
    return %arg0, %c0_i32 : i32, i32
  }
}

</mosaic_0001>

<llo_original>
// kernel: _forward_impl.1
$region0: #{_forward_impl.1}
  #allocation0 [shape = 'u32[]', space=smem, size = 0x4, offset = 0x4, fixed_abs, tag = 'smem constant byte address 0x4 - core index']
  #allocation1 [shape = 'u32[144,128]{1,0:T(1,128)}', space=vmem, size = 0x12000, scoped, tag = 'internal scratch']
  %s0 = inlined_call_operand.vmem [shape: bf16[8,16], index: 0, kind: input, shape index: {}]
  %s1 = inlined_call_operand.vmem [shape: bf16[16,768], index: 1, kind: input, shape index: {}]
  %s2 = inlined_call_operand.hbm [shape: bf16[384,384], index: 2, kind: input, shape index: {}]
  %s3 = inlined_call_operand.vmem [shape: f32[1,384], index: 3, kind: input, shape index: {}]
  %s4 = inlined_call_operand.hbm [shape: bf16[384,384], index: 4, kind: input, shape index: {}]
  %s5 = inlined_call_operand.vmem [shape: f32[1,384], index: 5, kind: input, shape index: {}]
  %s6 = inlined_call_operand.hbm [shape: bf16[768,128], index: 6, kind: input, shape index: {}]
  %s7 = inlined_call_operand.vmem [shape: f32[1,128], index: 7, kind: input, shape index: {}]
  %s8 = inlined_call_operand.vmem [shape: f32[8,8], index: 8, kind: output, shape index: {}]
  %s9 = sld [smem:[#allocation0]]
  $region54: #{_forward_impl.1} parent=0
    _
  %s11 = ssub.s32 1, %s9
  %s12 = scalar_select 0, %s11, %s9
  $region1: #{_forward_impl.1} parent=0
    #allocation2 [shape = 'u8[294912]{0}', space=vmem, size = 0x48000, scoped, tag = 'input window, operand 2, single buffered']
    #allocation3 [shape = 's32[1]{0}', space=sflag, size = 0x4, scoped, tag = 'scoped memory for _forward_impl.1']
    #allocation4 [shape = 'u8[294912]{0}', space=vmem, size = 0x48000, scoped, tag = 'input window, operand 4, single buffered']
    #allocation5 [shape = 's32[1]{0}', space=sflag, size = 0x4, scoped, tag = 'scoped memory for _forward_impl.1']
    #allocation6 [shape = 'u8[196608]{0}', space=vmem, size = 0x30000, scoped, tag = 'input window, operand 6, single buffered']
    %13 = vsyncpa [#allocation3], 0
    %14 = vsyncpa [#allocation5], 0
    // Predicated region
    $region2: #{_forward_impl.1} parent=1 // pred_check
      _
    $region3: #{_forward_impl.1} parent=1 // pred_check_branch
      %16 = sbr.rel (0) target = $region5
    $region4: #{_forward_impl.1} parent=1 // pred_region
      _
    $region5: #{_forward_impl.1} parent=1 // pred_fallthru
      _
    // Predicated region
    $region6: #{_forward_impl.1} parent=1 // pred_check
      _
    $region7: #{_forward_impl.1} parent=1 // pred_check_branch
      %18 = sbr.rel (0) target = $region9
    $region8: #{_forward_impl.1} parent=1 // pred_region
      _
    $region9: #{_forward_impl.1} parent=1 // pred_fallthru
      _
    // Predicated region
    $region10: #{_forward_impl.1} parent=1 // pred_check
      _
    $region11: #{_forward_impl.1} parent=1 // pred_check_branch
      %20 = sbr.rel (0) target = $region13
    $region12: #{_forward_impl.1} parent=1 // pred_region
      %s22 = ssub.s32 9216, 9216
      %23 = vsyncadd [#allocation3], %s22
      %s24 = sshll.u32 [#allocation2], 4
      %s25 = int_to_ptr.vmem [resolvable:$true] %s24
      %30 = dma.hbm_to_vmem [thread:$0]  %s2, 9216, %s25, [#allocation3], 192, 192, 12
    $region13: #{_forward_impl.1} parent=1 // pred_fallthru
      _
    // Predicated region
    $region14: #{_forward_impl.1} parent=1 // pred_check
      _
    $region15: #{_forward_impl.1} parent=1 // pred_check_branch
      %32 = sbr.rel (0) target = $region17
    $region16: #{_forward_impl.1} parent=1 // pred_region
      _
    $region17: #{_forward_impl.1} parent=1 // pred_fallthru
      _
    // Predicated region
    $region18: #{_forward_impl.1} parent=1 // pred_check
      _
    $region19: #{_forward_impl.1} parent=1 // pred_check_branch
      %34 = sbr.rel (0) target = $region21
    $region20: #{_forward_impl.1} parent=1 // pred_region
      %s36 = ssub.s32 9216, 9216
      %37 = vsyncadd [#allocation5], %s36
      %s38 = sshll.u32 [#allocation4], 4
      %s39 = int_to_ptr.vmem [resolvable:$true] %s38
      %44 = dma.hbm_to_vmem [thread:$0]  %s4, 9216, %s39, [#allocation5], 192, 192, 12
    $region21: #{_forward_impl.1} parent=1 // pred_fallthru
      _
    // Predicated region
    $region22: #{_forward_impl.1} parent=1 // pred_check
      _
    $region23: #{_forward_impl.1} parent=1 // pred_check_branch
      %46 = sbr.rel (0) target = $region25
    $region24: #{_forward_impl.1} parent=1 // pred_region
      _
    $region25: #{_forward_impl.1} parent=1 // pred_fallthru
      _
    // Predicated region
    $region26: #{_forward_impl.1} parent=1 // pred_check
      _
    $region27: #{_forward_impl.1} parent=1 // pred_check_branch
      %48 = sbr.rel (0) target = $region29
    $region28: #{_forward_impl.1} parent=1 // pred_region
      %s50 = ssub.s32 6144, 6144
      %51 = vsyncadd [#allocation5], %s50
      %s52 = sshll.u32 [#allocation6], 4
      %s53 = int_to_ptr.vmem [resolvable:$true] %s52
      %58 = dma.hbm_to_vmem [thread:$0]  %s6, 6144, %s53, [#allocation5], 64, 64, 4
    $region29: #{_forward_impl.1} parent=1 // pred_fallthru
      _
    // Predicated region
    $region30: #{_forward_impl.1} parent=1 // pred_check
      _
    $region31: #{_forward_impl.1} parent=1 // pred_check_branch
      %60 = sbr.rel (0) target = $region33
    $region32: #{_forward_impl.1} parent=1 // pred_region
      _
    $region33: #{_forward_impl.1} parent=1 // pred_fallthru
      _
    // Predicated region
    $region34: #{_forward_impl.1} parent=1 // pred_check
      _
    $region35: #{_forward_impl.1} parent=1 // pred_check_branch
      %62 = sbr.rel (0) target = $region37
    $region36: #{_forward_impl.1} parent=1 // pred_region
      %63 = dma.done [#allocation3], 9216
    $region37: #{_forward_impl.1} parent=1 // pred_fallthru
      _
    // Predicated region
    $region38: #{_forward_impl.1} parent=1 // pred_check
      _
    $region39: #{_forward_impl.1} parent=1 // pred_check_branch
      %65 = sbr.rel (0) target = $region41
    $region40: #{_forward_impl.1} parent=1 // pred_region
      %66 = dma.done [#allocation5], 9216
    $region41: #{_forward_impl.1} parent=1 // pred_fallthru
      _
    // Predicated region
    $region42: #{_forward_impl.1} parent=1 // pred_check
      _
    $region43: #{_forward_impl.1} parent=1 // pred_check_branch
      %68 = sbr.rel (0) target = $region45
    $region44: #{_forward_impl.1} parent=1 // pred_region
      %69 = dma.done [#allocation5], 6144
    $region45: #{_forward_impl.1} parent=1 // pred_fallthru
      _
    %v71 = vld [vmem:[%s0] sm:$0xf]
    %v72 = vld [vmem:[%s1] sm:$0xff]
    %v73 = vld [vmem:[%s1 + $0x8] sm:$0xff]
    %v74 = vld [vmem:[%s1 + $0x10] sm:$0xff]
    %v75 = vld [vmem:[%s1 + $0x18] sm:$0xff]
    %v76 = vld [vmem:[%s1 + $0x20] sm:$0xff]
    %v77 = vld [vmem:[%s1 + $0x28] sm:$0xff]
    %v84 = vunpack.c.l.b16 %v72
    %v85 = vunpack.c.h.b16 %v72
    %v86 = vunpack.c.l.b16 %v73
    %v87 = vunpack.c.h.b16 %v73
    %v88 = vunpack.c.l.b16 %v74
    %v89 = vunpack.c.h.b16 %v74
    %v90 = vunpack.c.l.b16 %v75
    %v91 = vunpack.c.h.b16 %v75
    %v92 = vunpack.c.l.b16 %v76
    %v93 = vunpack.c.h.b16 %v76
    %v94 = vunpack.c.l.b16 %v77
    %v95 = vunpack.c.h.b16 %v77
    %v96 = vpack.c.b16 %v90, %v84
    %v97 = vpack.c.b16 %v91, %v85
    %v98 = vpack.c.b16 %v92, %v86
    %v99 = vpack.c.b16 %v93, %v87
    %v100 = vpack.c.b16 %v94, %v88
    %v101 = vpack.c.b16 %v95, %v89
    %vm108 = vcmask 130048
    %v110 = vsel %vm108, %v71, 0
    %112 = vmatprep.subr.bf16.mxu0 %v97
    %113 = vmatpush1.bf16.msra.mxu0 %v96
    %114 = vmatprep.subr.bf16.mxu0 0
    %115 = vmatpush1.bf16.msra.mxu0 0
    %116 = vmatprep.subr.bf16.mxu0 0
    %117 = vmatpush1.bf16.msra.mxu0 0
    %118 = vmatprep.subr.bf16.mxu0 0
    %119 = vmatpush1.bf16.msra.mxu0 0
    %120 = vmatprep.subr.bf16.mxu0 0
    %121 = vmatpush1.bf16.msra.mxu0 0
    %122 = vmatprep.subr.bf16.mxu0 0
    %123 = vmatpush1.bf16.msra.mxu0 0
    %124 = vmatprep.subr.bf16.mxu0 0
    %125 = vmatpush1.bf16.msra.mxu0 0
    %126 = vmatprep.subr.bf16.mxu0 0
    %127 = vmatpush1.bf16.msra.mxu0 0
    %128 = vmatprep.subr.bf16.mxu0 0
    %129 = vmatpush1.bf16.msra.mxu0 0
    %130 = vmatprep.subr.bf16.mxu0 0
    %131 = vmatpush1.bf16.msra.mxu0 0
    %132 = vmatprep.subr.bf16.mxu0 0
    %133 = vmatpush1.bf16.msra.mxu0 0
    %134 = vmatprep.subr.bf16.mxu0 0
    %135 = vmatpush1.bf16.msra.mxu0 0
    %136 = vmatprep.subr.bf16.mxu0 0
    %137 = vmatpush1.bf16.msra.mxu0 0
    %138 = vmatprep.subr.bf16.mxu0 0
    %139 = vmatpush1.bf16.msra.mxu0 0
    %140 = vmatprep.subr.bf16.mxu0 0
    %141 = vmatpush1.bf16.msra.mxu0 0
    %142 = vmatprep.subr.bf16.mxu0 0
    %143 = vmatpush1.bf16.msra.mxu0 0
    %144 = vmatprep.mubr.bf16.mxu0 0
    %145 = vmatmul.mubr.bf16.gmra.mrb[0].mxu0 %v110
    %v146 = vpop.f32.mrb[0].mxu0
    %v147 = vadd.f32 0.0, %v146
    %v148 = vpop.f32.mrb[0].mxu0
    %v149 = vadd.f32 0.0, %v148
    %v150 = vpop.f32.mrb[0].mxu0
    %v151 = vpop.f32.mrb[0].mxu0
    %152 = vdwg.mxu0
    %153 = vmatprep.subr.bf16.mxu0 %v99
    %154 = vmatpush1.bf16.msra.mxu0 %v98
    %155 = vmatprep.subr.bf16.mxu0 0
    %156 = vmatpush1.bf16.msra.mxu0 0
    %157 = vmatprep.subr.bf16.mxu0 0
    %158 = vmatpush1.bf16.msra.mxu0 0
    %159 = vmatprep.subr.bf16.mxu0 0
    %160 = vmatpush1.bf16.msra.mxu0 0
    %161 = vmatprep.subr.bf16.mxu0 0
    %162 = vmatpush1.bf16.msra.mxu0 0
    %163 = vmatprep.subr.bf16.mxu0 0
    %164 = vmatpush1.bf16.msra.mxu0 0
    %165 = vmatprep.subr.bf16.mxu0 0
    %166 = vmatpush1.bf16.msra.mxu0 0
    %167 = vmatprep.subr.bf16.mxu0 0
    %168 = vmatpush1.bf16.msra.mxu0 0
    %169 = vmatprep.subr.bf16.mxu0 0
    %170 = vmatpush1.bf16.msra.mxu0 0
    %171 = vmatprep.subr.bf16.mxu0 0
    %172 = vmatpush1.bf16.msra.mxu0 0
    %173 = vmatprep.subr.bf16.mxu0 0
    %174 = vmatpush1.bf16.msra.mxu0 0
    %175 = vmatprep.subr.bf16.mxu0 0
    %176 = vmatpush1.bf16.msra.mxu0 0
    %177 = vmatprep.subr.bf16.mxu0 0
    %178 = vmatpush1.bf16.msra.mxu0 0
    %179 = vmatprep.subr.bf16.mxu0 0
    %180 = vmatpush1.bf16.msra.mxu0 0
    %181 = vmatprep.subr.bf16.mxu0 0
    %182 = vmatpush1.bf16.msra.mxu0 0
    %183 = vmatprep.subr.bf16.mxu0 0
    %184 = vmatpush1.bf16.msra.mxu0 0
    %185 = vmatprep.mubr.bf16.mxu0 0
    %186 = vmatmul.mubr.bf16.gmra.mrb[0].mxu0 %v110
    %v187 = vpop.f32.mrb[0].mxu0
    %v188 = vadd.f32 0.0, %v187
    %v189 = vpop.f32.mrb[0].mxu0
    %v190 = vadd.f32 0.0, %v189
    %v191 = vpop.f32.mrb[0].mxu0
    %v192 = vpop.f32.mrb[0].mxu0
    %193 = vdwg.mxu0
    %194 = vmatprep.subr.bf16.mxu0 %v101
    %195 = vmatpush1.bf16.msra.mxu0 %v100
    %196 = vmatprep.subr.bf16.mxu0 0
    %197 = vmatpush1.bf16.msra.mxu0 0
    %198 = vmatprep.subr.bf16.mxu0 0
    %199 = vmatpush1.bf16.msra.mxu0 0
    %200 = vmatprep.subr.bf16.mxu0 0
    %201 = vmatpush1.bf16.msra.mxu0 0
    %202 = vmatprep.subr.bf16.mxu0 0
    %203 = vmatpush1.bf16.msra.mxu0 0
    %204 = vmatprep.subr.bf16.mxu0 0
    %205 = vmatpush1.bf16.msra.mxu0 0
    %206 = vmatprep.subr.bf16.mxu0 0
    %207 = vmatpush1.bf16.msra.mxu0 0
    %208 = vmatprep.subr.bf16.mxu0 0
    %209 = vmatpush1.bf16.msra.mxu0 0
    %210 = vmatprep.subr.bf16.mxu0 0
    %211 = vmatpush1.bf16.msra.mxu0 0
    %212 = vmatprep.subr.bf16.mxu0 0
    %213 = vmatpush1.bf16.msra.mxu0 0
    %214 = vmatprep.subr.bf16.mxu0 0
    %215 = vmatpush1.bf16.msra.mxu0 0
    %216 = vmatprep.subr.bf16.mxu0 0
    %217 = vmatpush1.bf16.msra.mxu0 0
    %218 = vmatprep.subr.bf16.mxu0 0
    %219 = vmatpush1.bf16.msra.mxu0 0
    %220 = vmatprep.subr.bf16.mxu0 0
    %221 = vmatpush1.bf16.msra.mxu0 0
    %222 = vmatprep.subr.bf16.mxu0 0
    %223 = vmatpush1.bf16.msra.mxu0 0
    %224 = vmatprep.subr.bf16.mxu0 0
    %225 = vmatpush1.bf16.msra.mxu0 0
    %226 = vmatprep.mubr.bf16.mxu0 0
    %227 = vmatmul.mubr.bf16.gmra.mrb[0].mxu0 %v110
    %v228 = vpop.f32.mrb[0].mxu0
    %v229 = vadd.f32 0.0, %v228
    %v230 = vpop.f32.mrb[0].mxu0
    %v231 = vadd.f32 0.0, %v230
    %v232 = vpop.f32.mrb[0].mxu0
    %v233 = vpop.f32.mrb[0].mxu0
    %234 = vdwg.mxu0
    %v235 = vmax.f32 %v147, 0.0
    %v236 = vmax.f32 %v149, 0.0
    %v237 = vmax.f32 %v188, 0.0
    %v238 = vmax.f32 %v190, 0.0
    %v239 = vmax.f32 %v229, 0.0
    %v240 = vmax.f32 %v231, 0.0
    %v241 = vpack.c.bf16 %v235, %v235
    %v242 = vpack.c.bf16 %v236, %v236
    %v243 = vpack.c.bf16 %v237, %v237
    %v244 = vpack.c.bf16 %v238, %v238
    %v245 = vpack.c.bf16 %v239, %v239
    %v246 = vpack.c.bf16 %v240, %v240
    %v247 = vld [vmem:[#allocation2] sm:$0xff]
    %v248 = vld [vmem:[#allocation2 + $0x8] sm:$0xf]
    %v249 = vld [vmem:[#allocation2 + $0xc] sm:$0xff]
    %v250 = vld [vmem:[#allocation2 + $0x14] sm:$0xf]
    %v251 = vld [vmem:[#allocation2 + $0x18] sm:$0xff]
    %v252 = vld [vmem:[#allocation2 + $0x20] sm:$0xf]
    %v253 = vld [vmem:[#allocation2 + $0x24] sm:$0xff]
    %v254 = vld [vmem:[#allocation2 + $0x2c] sm:$0xf]
    %v255 = vld [vmem:[#allocation2 + $0x30] sm:$0xff]
    %v256 = vld [vmem:[#allocation2 + $0x38] sm:$0xf]
    %v257 = vld [vmem:[#allocation2 + $0x3c] sm:$0xff]
    %v258 = vld [vmem:[#allocation2 + $0x44] sm:$0xf]
    %v259 = vld [vmem:[#allocation2 + $0x48] sm:$0xff]
    %v260 = vld [vmem:[#allocation2 + $0x50] sm:$0xf]
    %v261 = vld [vmem:[#allocation2 + $0x54] sm:$0xff]
    %v262 = vld [vmem:[#allocation2 + $0x5c] sm:$0xf]
    %v263 = vld [vmem:[#allocation2 + $0x60] sm:$0xff]
    %v264 = vld [vmem:[#allocation2 + $0x68] sm:$0xf]
    %v265 = vld [vmem:[#allocation2 + $0x6c] sm:$0xff]
    %v266 = vld [vmem:[#allocation2 + $0x74] sm:$0xf]
    %v267 = vld [vmem:[#allocation2 + $0x78] sm:$0xff]
    %v268 = vld [vmem:[#allocation2 + $0x80] sm:$0xf]
    %v269 = vld [vmem:[#allocation2 + $0x84] sm:$0xff]
    %v270 = vld [vmem:[#allocation2 + $0x8c] sm:$0xf]
    %v271 = vld [vmem:[#allocation2 + $0x90] sm:$0xff]
    %v272 = vld [vmem:[#allocation2 + $0x98] sm:$0xf]
    %v273 = vld [vmem:[#allocation2 + $0x9c] sm:$0xff]
    %v274 = vld [vmem:[#allocation2 + $0xa4] sm:$0xf]
    %v275 = vld [vmem:[#allocation2 + $0xa8] sm:$0xff]
    %v276 = vld [vmem:[#allocation2 + $0xb0] sm:$0xf]
    %v277 = vld [vmem:[#allocation2 + $0xb4] sm:$0xff]
    %v278 = vld [vmem:[#allocation2 + $0xbc] sm:$0xf]
    %v279 = vld [vmem:[#allocation2 + $0xc0] sm:$0xff]
    %v280 = vld [vmem:[#allocation2 + $0xc8] sm:$0xf]
    %v281 = vld [vmem:[#allocation2 + $0xcc] sm:$0xff]
    %v282 = vld [vmem:[#allocation2 + $0xd4] sm:$0xf]
    %v283 = vld [vmem:[#allocation2 + $0xd8] sm:$0xff]
    %v284 = vld [vmem:[#allocation2 + $0xe0] sm:$0xf]
    %v285 = vld [vmem:[#allocation2 + $0xe4] sm:$0xff]
    %v286 = vld [vmem:[#allocation2 + $0xec] sm:$0xf]
    %v287 = vld [vmem:[#allocation2 + $0xf0] sm:$0xff]
    %v288 = vld [vmem:[#allocation2 + $0xf8] sm:$0xf]
    %v289 = vld [vmem:[#allocation2 + $0xfc] sm:$0xff]
    %v290 = vld [vmem:[#allocation2 + $0x104] sm:$0xf]
    %v291 = vld [vmem:[#allocation2 + $0x108] sm:$0xff]
    %v292 = vld [vmem:[#allocation2 + $0x110] sm:$0xf]
    %v293 = vld [vmem:[#allocation2 + $0x114] sm:$0xff]
    %v294 = vld [vmem:[#allocation2 + $0x11c] sm:$0xf]
    %v295 = vld [vmem:[#allocation2 + $0x120] sm:$0xff]
    %v296 = vld [vmem:[#allocation2 + $0x128] sm:$0xf]
    %v297 = vld [vmem:[#allocation2 + $0x12c] sm:$0xff]
    %v298 = vld [vmem:[#allocation2 + $0x134] sm:$0xf]
    %v299 = vld [vmem:[#allocation2 + $0x138] sm:$0xff]
    %v300 = vld [vmem:[#allocation2 + $0x140] sm:$0xf]
    %v301 = vld [vmem:[#allocation2 + $0x144] sm:$0xff]
    %v302 = vld [vmem:[#allocation2 + $0x14c] sm:$0xf]
    %v303 = vld [vmem:[#allocation2 + $0x150] sm:$0xff]
    %v304 = vld [vmem:[#allocation2 + $0x158] sm:$0xf]
    %v305 = vld [vmem:[#allocation2 + $0x15c] sm:$0xff]
    %v306 = vld [vmem:[#allocation2 + $0x164] sm:$0xf]
    %v307 = vld [vmem:[#allocation2 + $0x168] sm:$0xff]
    %v308 = vld [vmem:[#allocation2 + $0x170] sm:$0xf]
    %v309 = vld [vmem:[#allocation2 + $0x174] sm:$0xff]
    %v310 = vld [vmem:[#allocation2 + $0x17c] sm:$0xf]
    %v311 = vld [vmem:[#allocation2 + $0x180] sm:$0xff]
    %v312 = vld [vmem:[#allocation2 + $0x188] sm:$0xf]
    %v313 = vld [vmem:[#allocation2 + $0x18c] sm:$0xff]
    %v314 = vld [vmem:[#allocation2 + $0x194] sm:$0xf]
    %v315 = vld [vmem:[#allocation2 + $0x198] sm:$0xff]
    %v316 = vld [vmem:[#allocation2 + $0x1a0] sm:$0xf]
    %v317 = vld [vmem:[#allocation2 + $0x1a4] sm:$0xff]
    %v318 = vld [vmem:[#allocation2 + $0x1ac] sm:$0xf]
    %v319 = vld [vmem:[#allocation2 + $0x1b0] sm:$0xff]
    %v320 = vld [vmem:[#allocation2 + $0x1b8] sm:$0xf]
    %v321 = vld [vmem:[#allocation2 + $0x1bc] sm:$0xff]
    %v322 = vld [vmem:[#allocation2 + $0x1c4] sm:$0xf]
    %v323 = vld [vmem:[#allocation2 + $0x1c8] sm:$0xff]
    %v324 = vld [vmem:[#allocation2 + $0x1d0] sm:$0xf]
    %v325 = vld [vmem:[#allocation2 + $0x1d4] sm:$0xff]
    %v326 = vld [vmem:[#allocation2 + $0x1dc] sm:$0xf]
    %v327 = vld [vmem:[#allocation2 + $0x1e0] sm:$0xff]
    %v328 = vld [vmem:[#allocation2 + $0x1e8] sm:$0xf]
    %v329 = vld [vmem:[#allocation2 + $0x1ec] sm:$0xff]
    %v330 = vld [vmem:[#allocation2 + $0x1f4] sm:$0xf]
    %v331 = vld [vmem:[#allocation2 + $0x1f8] sm:$0xff]
    %v332 = vld [vmem:[#allocation2 + $0x200] sm:$0xf]
    %v333 = vld [vmem:[#allocation2 + $0x204] sm:$0xff]
    %v334 = vld [vmem:[#allocation2 + $0x20c] sm:$0xf]
    %v335 = vld [vmem:[#allocation2 + $0x210] sm:$0xff]
    %v336 = vld [vmem:[#allocation2 + $0x218] sm:$0xf]
    %v337 = vld [vmem:[#allocation2 + $0x21c] sm:$0xff]
    %v338 = vld [vmem:[#allocation2 + $0x224] sm:$0xf]
    %v339 = vld [vmem:[#allocation2 + $0x228] sm:$0xff]
    %v340 = vld [vmem:[#allocation2 + $0x230] sm:$0xf]
    %v341 = vld [vmem:[#allocation2 + $0x234] sm:$0xff]
    %v342 = vld [vmem:[#allocation2 + $0x23c] sm:$0xf]
    %v343 = vld [vmem:[#allocation4] sm:$0xff]
    %v344 = vld [vmem:[#allocation4 + $0x8] sm:$0xf]
    %v345 = vld [vmem:[#allocation4 + $0xc] sm:$0xff]
    %v346 = vld [vmem:[#allocation4 + $0x14] sm:$0xf]
    %v347 = vld [vmem:[#allocation4 + $0x18] sm:$0xff]
    %v348 = vld [vmem:[#allocation4 + $0x20] sm:$0xf]
    %v349 = vld [vmem:[#allocation4 + $0x24] sm:$0xff]
    %v350 = vld [vmem:[#allocation4 + $0x2c] sm:$0xf]
    %v351 = vld [vmem:[#allocation4 + $0x30] sm:$0xff]
    %v352 = vld [vmem:[#allocation4 + $0x38] sm:$0xf]
    %v353 = vld [vmem:[#allocation4 + $0x3c] sm:$0xff]
    %v354 = vld [vmem:[#allocation4 + $0x44] sm:$0xf]
    %v355 = vld [vmem:[#allocation4 + $0x48] sm:$0xff]
    %v356 = vld [vmem:[#allocation4 + $0x50] sm:$0xf]
    %v357 = vld [vmem:[#allocation4 + $0x54] sm:$0xff]
    %v358 = vld [vmem:[#allocation4 + $0x5c] sm:$0xf]
    %v359 = vld [vmem:[#allocation4 + $0x60] sm:$0xff]
    %v360 = vld [vmem:[#allocation4 + $0x68] sm:$0xf]
    %v361 = vld [vmem:[#allocation4 + $0x6c] sm:$0xff]
    %v362 = vld [vmem:[#allocation4 + $0x74] sm:$0xf]
    %v363 = vld [vmem:[#allocation4 + $0x78] sm:$0xff]
    %v364 = vld [vmem:[#allocation4 + $0x80] sm:$0xf]
    %v365 = vld [vmem:[#allocation4 + $0x84] sm:$0xff]
    %v366 = vld [vmem:[#allocation4 + $0x8c] sm:$0xf]
    %v367 = vld [vmem:[#allocation4 + $0x90] sm:$0xff]
    %v368 = vld [vmem:[#allocation4 + $0x98] sm:$0xf]
    %v369 = vld [vmem:[#allocation4 + $0x9c] sm:$0xff]
    %v370 = vld [vmem:[#allocation4 + $0xa4] sm:$0xf]
    %v371 = vld [vmem:[#allocation4 + $0xa8] sm:$0xff]
    %v372 = vld [vmem:[#allocation4 + $0xb0] sm:$0xf]
    %v373 = vld [vmem:[#allocation4 + $0xb4] sm:$0xff]
    %v374 = vld [vmem:[#allocation4 + $0xbc] sm:$0xf]
    %v375 = vld [vmem:[#allocation4 + $0xc0] sm:$0xff]
    %v376 = vld [vmem:[#allocation4 + $0xc8] sm:$0xf]
    %v377 = vld [vmem:[#allocation4 + $0xcc] sm:$0xff]
    %v378 = vld [vmem:[#allocation4 + $0xd4] sm:$0xf]
    %v379 = vld [vmem:[#allocation4 + $0xd8] sm:$0xff]
    %v380 = vld [vmem:[#allocation4 + $0xe0] sm:$0xf]
    %v381 = vld [vmem:[#allocation4 + $0xe4] sm:$0xff]
    %v382 = vld [vmem:[#allocation4 + $0xec] sm:$0xf]
    %v383 = vld [vmem:[#allocation4 + $0xf0] sm:$0xff]
    %v384 = vld [vmem:[#allocation4 + $0xf8] sm:$0xf]
    %v385 = vld [vmem:[#allocation4 + $0xfc] sm:$0xff]
    %v386 = vld [vmem:[#allocation4 + $0x104] sm:$0xf]
    %v387 = vld [vmem:[#allocation4 + $0x108] sm:$0xff]
    %v388 = vld [vmem:[#allocation4 + $0x110] sm:$0xf]
    %v389 = vld [vmem:[#allocation4 + $0x114] sm:$0xff]
    %v390 = vld [vmem:[#allocation4 + $0x11c] sm:$0xf]
    %v391 = vld [vmem:[#allocation4 + $0x120] sm:$0xff]
    %v392 = vld [vmem:[#allocation4 + $0x128] sm:$0xf]
    %v393 = vld [vmem:[#allocation4 + $0x12c] sm:$0xff]
    %v394 = vld [vmem:[#allocation4 + $0x134] sm:$0xf]
    %v395 = vld [vmem:[#allocation4 + $0x138] sm:$0xff]
    %v396 = vld [vmem:[#allocation4 + $0x140] sm:$0xf]
    %v397 = vld [vmem:[#allocation4 + $0x144] sm:$0xff]
    %v398 = vld [vmem:[#allocation4 + $0x14c] sm:$0xf]
    %v399 = vld [vmem:[#allocation4 + $0x150] sm:$0xff]
    %v400 = vld [vmem:[#allocation4 + $0x158] sm:$0xf]
    %v401 = vld [vmem:[#allocation4 + $0x15c] sm:$0xff]
    %v402 = vld [vmem:[#allocation4 + $0x164] sm:$0xf]
    %v403 = vld [vmem:[#allocation4 + $0x168] sm:$0xff]
    %v404 = vld [vmem:[#allocation4 + $0x170] sm:$0xf]
    %v405 = vld [vmem:[#allocation4 + $0x174] sm:$0xff]
    %v406 = vld [vmem:[#allocation4 + $0x17c] sm:$0xf]
    %v407 = vld [vmem:[#allocation4 + $0x180] sm:$0xff]
    %v408 = vld [vmem:[#allocation4 + $0x188] sm:$0xf]
    %v409 = vld [vmem:[#allocation4 + $0x18c] sm:$0xff]
    %v410 = vld [vmem:[#allocation4 + $0x194] sm:$0xf]
    %v411 = vld [vmem:[#allocation4 + $0x198] sm:$0xff]
    %v412 = vld [vmem:[#allocation4 + $0x1a0] sm:$0xf]
    %v413 = vld [vmem:[#allocation4 + $0x1a4] sm:$0xff]
    %v414 = vld [vmem:[#allocation4 + $0x1ac] sm:$0xf]
    %v415 = vld [vmem:[#allocation4 + $0x1b0] sm:$0xff]
    %v416 = vld [vmem:[#allocation4 + $0x1b8] sm:$0xf]
    %v417 = vld [vmem:[#allocation4 + $0x1bc] sm:$0xff]
    %v418 = vld [vmem:[#allocation4 + $0x1c4] sm:$0xf]
    %v419 = vld [vmem:[#allocation4 + $0x1c8] sm:$0xff]
    %v420 = vld [vmem:[#allocation4 + $0x1d0] sm:$0xf]
    %v421 = vld [vmem:[#allocation4 + $0x1d4] sm:$0xff]
    %v422 = vld [vmem:[#allocation4 + $0x1dc] sm:$0xf]
    %v423 = vld [vmem:[#allocation4 + $0x1e0] sm:$0xff]
    %v424 = vld [vmem:[#allocation4 + $0x1e8] sm:$0xf]
    %v425 = vld [vmem:[#allocation4 + $0x1ec] sm:$0xff]
    %v426 = vld [vmem:[#allocation4 + $0x1f4] sm:$0xf]
    %v427 = vld [vmem:[#allocation4 + $0x1f8] sm:$0xff]
    %v428 = vld [vmem:[#allocation4 + $0x200] sm:$0xf]
    %v429 = vld [vmem:[#allocation4 + $0x204] sm:$0xff]
    %v430 = vld [vmem:[#allocation4 + $0x20c] sm:$0xf]
    %v431 = vld [vmem:[#allocation4 + $0x210] sm:$0xff]
    %v432 = vld [vmem:[#allocation4 + $0x218] sm:$0xf]
    %v433 = vld [vmem:[#allocation4 + $0x21c] sm:$0xff]
    %v434 = vld [vmem:[#allocation4 + $0x224] sm:$0xf]
    %v435 = vld [vmem:[#allocation4 + $0x228] sm:$0xff]
    %v436 = vld [vmem:[#allocation4 + $0x230] sm:$0xf]
    %v437 = vld [vmem:[#allocation4 + $0x234] sm:$0xff]
    %v438 = vld [vmem:[#allocation4 + $0x23c] sm:$0xf]
    %v439 = vld [vmem:[%s3] sm:$0x7]
    %v441 = vlaneseq
    %v442 = vshrl.u32 %v441, 7
    %v443 = vsub.s32 0, %v442
    %v444 = vrot.slane %v439, %v443
    %v445 = vlaneseq
    %v446 = vshrl.u32 %v445, 7
    %v447 = vsub.s32 1, %v446
    %v448 = vrot.slane %v439, %v447
    %v449 = vlaneseq
    %v450 = vshrl.u32 %v449, 7
    %v451 = vsub.s32 2, %v450
    %v452 = vrot.slane %v439, %v451
    %v552 = vunpack.c.l.b16 %v247
    %v553 = vunpack.c.h.b16 %v247
    %v554 = vunpack.c.l.b16 %v248
    %v555 = vunpack.c.l.b16 %v249
    %v556 = vunpack.c.h.b16 %v249
    %v557 = vunpack.c.l.b16 %v250
    %v558 = vunpack.c.l.b16 %v251
    %v559 = vunpack.c.h.b16 %v251
    %v560 = vunpack.c.l.b16 %v252
    %v561 = vunpack.c.l.b16 %v253
    %v562 = vunpack.c.h.b16 %v253
    %v563 = vunpack.c.l.b16 %v254
    %v564 = vunpack.c.l.b16 %v255
    %v565 = vunpack.c.h.b16 %v255
    %v566 = vunpack.c.l.b16 %v256
    %v567 = vunpack.c.l.b16 %v257
    %v568 = vunpack.c.h.b16 %v257
    %v569 = vunpack.c.l.b16 %v258
    %v570 = vunpack.c.l.b16 %v259
    %v571 = vunpack.c.h.b16 %v259
    %v572 = vunpack.c.l.b16 %v260
    %v573 = vunpack.c.l.b16 %v261
    %v574 = vunpack.c.h.b16 %v261
    %v575 = vunpack.c.l.b16 %v262
    %v576 = vunpack.c.l.b16 %v263
    %v577 = vunpack.c.h.b16 %v263
    %v578 = vunpack.c.l.b16 %v264
    %v579 = vunpack.c.l.b16 %v265
    %v580 = vunpack.c.h.b16 %v265
    %v581 = vunpack.c.l.b16 %v266
    %v582 = vunpack.c.l.b16 %v267
    %v583 = vunpack.c.h.b16 %v267
    %v584 = vunpack.c.l.b16 %v268
    %v585 = vunpack.c.l.b16 %v269
    %v586 = vunpack.c.h.b16 %v269
    %v587 = vunpack.c.l.b16 %v270
    %v588 = vunpack.c.l.b16 %v271
    %v589 = vunpack.c.h.b16 %v271
    %v590 = vunpack.c.l.b16 %v272
    %v591 = vunpack.c.l.b16 %v273
    %v592 = vunpack.c.h.b16 %v273
    %v593 = vunpack.c.l.b16 %v274
    %v594 = vunpack.c.l.b16 %v275
    %v595 = vunpack.c.h.b16 %v275
    %v596 = vunpack.c.l.b16 %v276
    %v597 = vunpack.c.l.b16 %v277
    %v598 = vunpack.c.h.b16 %v277
    %v599 = vunpack.c.l.b16 %v278
    %v600 = vunpack.c.l.b16 %v279
    %v601 = vunpack.c.h.b16 %v279
    %v602 = vunpack.c.l.b16 %v280
    %v603 = vunpack.c.l.b16 %v281
    %v604 = vunpack.c.h.b16 %v281
    %v605 = vunpack.c.l.b16 %v282
    %v606 = vunpack.c.l.b16 %v283
    %v607 = vunpack.c.h.b16 %v283
    %v608 = vunpack.c.l.b16 %v284
    %v609 = vunpack.c.l.b16 %v285
    %v610 = vunpack.c.h.b16 %v285
    %v611 = vunpack.c.l.b16 %v286
    %v612 = vunpack.c.l.b16 %v287
    %v613 = vunpack.c.h.b16 %v287
    %v614 = vunpack.c.l.b16 %v288
    %v615 = vunpack.c.l.b16 %v289
    %v616 = vunpack.c.h.b16 %v289
    %v617 = vunpack.c.l.b16 %v290
    %v618 = vunpack.c.l.b16 %v291
    %v619 = vunpack.c.h.b16 %v291
    %v620 = vunpack.c.l.b16 %v292
    %v621 = vunpack.c.l.b16 %v293
    %v622 = vunpack.c.h.b16 %v293
    %v623 = vunpack.c.l.b16 %v294
    %v624 = vunpack.c.l.b16 %v295
    %v625 = vunpack.c.h.b16 %v295
    %v626 = vunpack.c.l.b16 %v296
    %v627 = vunpack.c.l.b16 %v297
    %v628 = vunpack.c.h.b16 %v297
    %v629 = vunpack.c.l.b16 %v298
    %v630 = vunpack.c.l.b16 %v299
    %v631 = vunpack.c.h.b16 %v299
    %v632 = vunpack.c.l.b16 %v300
    %v633 = vunpack.c.l.b16 %v301
    %v634 = vunpack.c.h.b16 %v301
    %v635 = vunpack.c.l.b16 %v302
    %v636 = vunpack.c.l.b16 %v303
    %v637 = vunpack.c.h.b16 %v303
    %v638 = vunpack.c.l.b16 %v304
    %v639 = vunpack.c.l.b16 %v305
    %v640 = vunpack.c.h.b16 %v305
    %v641 = vunpack.c.l.b16 %v306
    %v642 = vunpack.c.l.b16 %v307
    %v643 = vunpack.c.h.b16 %v307
    %v644 = vunpack.c.l.b16 %v308
    %v645 = vunpack.c.l.b16 %v309
    %v646 = vunpack.c.h.b16 %v309
    %v647 = vunpack.c.l.b16 %v310
    %v648 = vunpack.c.l.b16 %v311
    %v649 = vunpack.c.h.b16 %v311
    %v650 = vunpack.c.l.b16 %v312
    %v651 = vunpack.c.l.b16 %v313
    %v652 = vunpack.c.h.b16 %v313
    %v653 = vunpack.c.l.b16 %v314
    %v654 = vunpack.c.l.b16 %v315
    %v655 = vunpack.c.h.b16 %v315
    %v656 = vunpack.c.l.b16 %v316
    %v657 = vunpack.c.l.b16 %v317
    %v658 = vunpack.c.h.b16 %v317
    %v659 = vunpack.c.l.b16 %v318
    %v660 = vunpack.c.l.b16 %v319
    %v661 = vunpack.c.h.b16 %v319
    %v662 = vunpack.c.l.b16 %v320
    %v663 = vunpack.c.l.b16 %v321
    %v664 = vunpack.c.h.b16 %v321
    %v665 = vunpack.c.l.b16 %v322
    %v666 = vunpack.c.l.b16 %v323
    %v667 = vunpack.c.h.b16 %v323
    %v668 = vunpack.c.l.b16 %v324
    %v669 = vunpack.c.l.b16 %v325
    %v670 = vunpack.c.h.b16 %v325
    %v671 = vunpack.c.l.b16 %v326
    %v672 = vunpack.c.l.b16 %v327
    %v673 = vunpack.c.h.b16 %v327
    %v674 = vunpack.c.l.b16 %v328
    %v675 = vunpack.c.l.b16 %v329
    %v676 = vunpack.c.h.b16 %v329
    %v677 = vunpack.c.l.b16 %v330
    %v678 = vunpack.c.l.b16 %v331
    %v679 = vunpack.c.h.b16 %v331
    %v680 = vunpack.c.l.b16 %v332
    %v681 = vunpack.c.l.b16 %v333
    %v682 = vunpack.c.h.b16 %v333
    %v683 = vunpack.c.l.b16 %v334
    %v684 = vunpack.c.l.b16 %v335
    %v685 = vunpack.c.h.b16 %v335
    %v686 = vunpack.c.l.b16 %v336
    %v687 = vunpack.c.l.b16 %v337
    %v688 = vunpack.c.h.b16 %v337
    %v689 = vunpack.c.l.b16 %v338
    %v690 = vunpack.c.l.b16 %v339
    %v691 = vunpack.c.h.b16 %v339
    %v692 = vunpack.c.l.b16 %v340
    %v693 = vunpack.c.l.b16 %v341
    %v694 = vunpack.c.h.b16 %v341
    %v695 = vunpack.c.l.b16 %v342
    %v696 = vpack.c.b16 %v555, %v552
    %v697 = vpack.c.b16 %v556, %v553
    %v698 = vpack.c.b16 %v557, %v554
    %v699 = vpack.c.b16 %v561, %v558
    %v700 = vpack.c.b16 %v562, %v559
    %v701 = vpack.c.b16 %v563, %v560
    %v702 = vpack.c.b16 %v567, %v564
    %v703 = vpack.c.b16 %v568, %v565
    %v704 = vpack.c.b16 %v569, %v566
    %v705 = vpack.c.b16 %v573, %v570
    %v706 = vpack.c.b16 %v574, %v571
    %v707 = vpack.c.b16 %v575, %v572
    %v708 = vpack.c.b16 %v579, %v576
    %v709 = vpack.c.b16 %v580, %v577
    %v710 = vpack.c.b16 %v581, %v578
    %v711 = vpack.c.b16 %v585, %v582
    %v712 = vpack.c.b16 %v586, %v583
    %v713 = vpack.c.b16 %v587, %v584
    %v714 = vpack.c.b16 %v591, %v588
    %v715 = vpack.c.b16 %v592, %v589
    %v716 = vpack.c.b16 %v593, %v590
    %v717 = vpack.c.b16 %v597, %v594
    %v718 = vpack.c.b16 %v598, %v595
    %v719 = vpack.c.b16 %v599, %v596
    %v720 = vpack.c.b16 %v603, %v600
    %v721 = vpack.c.b16 %v604, %v601
    %v722 = vpack.c.b16 %v605, %v602
    %v723 = vpack.c.b16 %v609, %v606
    %v724 = vpack.c.b16 %v610, %v607
    %v725 = vpack.c.b16 %v611, %v608
    %v726 = vpack.c.b16 %v615, %v612
    %v727 = vpack.c.b16 %v616, %v613
    %v728 = vpack.c.b16 %v617, %v614
    %v729 = vpack.c.b16 %v621, %v618
    %v730 = vpack.c.b16 %v622, %v619
    %v731 = vpack.c.b16 %v623, %v620
    %v732 = vpack.c.b16 %v627, %v624
    %v733 = vpack.c.b16 %v628, %v625
    %v734 = vpack.c.b16 %v629, %v626
    %v735 = vpack.c.b16 %v633, %v630
    %v736 = vpack.c.b16 %v634, %v631
    %v737 = vpack.c.b16 %v635, %v632
    %v738 = vpack.c.b16 %v639, %v636
    %v739 = vpack.c.b16 %v640, %v637
    %v740 = vpack.c.b16 %v641, %v638
    %v741 = vpack.c.b16 %v645, %v642
    %v742 = vpack.c.b16 %v646, %v643
    %v743 = vpack.c.b16 %v647, %v644
    %v744 = vpack.c.b16 %v651, %v648
    %v745 = vpack.c.b16 %v652, %v649
    %v746 = vpack.c.b16 %v653, %v650
    %v747 = vpack.c.b16 %v657, %v654
    %v748 = vpack.c.b16 %v658, %v655
    %v749 = vpack.c.b16 %v659, %v656
    %v750 = vpack.c.b16 %v663, %v660
    %v751 = vpack.c.b16 %v664, %v661
    %v752 = vpack.c.b16 %v665, %v662
    %v753 = vpack.c.b16 %v669, %v666
    %v754 = vpack.c.b16 %v670, %v667
    %v755 = vpack.c.b16 %v671, %v668
    %v756 = vpack.c.b16 %v675, %v672
    %v757 = vpack.c.b16 %v676, %v673
    %v758 = vpack.c.b16 %v677, %v674
    %v759 = vpack.c.b16 %v681, %v678
    %v760 = vpack.c.b16 %v682, %v679
    %v761 = vpack.c.b16 %v683, %v680
    %v762 = vpack.c.b16 %v687, %v684
    %v763 = vpack.c.b16 %v688, %v685
    %v764 = vpack.c.b16 %v689, %v686
    %v765 = vpack.c.b16 %v693, %v690
    %v766 = vpack.c.b16 %v694, %v691
    %v767 = vpack.c.b16 %v695, %v692
    %840 = vmatprep.subr.bf16.mxu0 %v697
    %841 = vmatpush1.bf16.msra.mxu0 %v696
    %842 = vmatprep.subr.bf16.mxu0 %v700
    %843 = vmatpush1.bf16.msra.mxu0 %v699
    %844 = vmatprep.subr.bf16.mxu0 %v703
    %845 = vmatpush1.bf16.msra.mxu0 %v702
    %846 = vmatprep.subr.bf16.mxu0 %v706
    %847 = vmatpush1.bf16.msra.mxu0 %v705
    %848 = vmatprep.subr.bf16.mxu0 %v709
    %849 = vmatpush1.bf16.msra.mxu0 %v708
    %850 = vmatprep.subr.bf16.mxu0 %v712
    %851 = vmatpush1.bf16.msra.mxu0 %v711
    %852 = vmatprep.subr.bf16.mxu0 %v715
    %853 = vmatpush1.bf16.msra.mxu0 %v714
    %854 = vmatprep.subr.bf16.mxu0 %v718
    %855 = vmatpush1.bf16.msra.mxu0 %v717
    %856 = vmatprep.subr.bf16.mxu0 %v721
    %857 = vmatpush1.bf16.msra.mxu0 %v720
    %858 = vmatprep.subr.bf16.mxu0 %v724
    %859 = vmatpush1.bf16.msra.mxu0 %v723
    %860 = vmatprep.subr.bf16.mxu0 %v727
    %861 = vmatpush1.bf16.msra.mxu0 %v726
    %862 = vmatprep.subr.bf16.mxu0 %v730
    %863 = vmatpush1.bf16.msra.mxu0 %v729
    %864 = vmatprep.subr.bf16.mxu0 %v733
    %865 = vmatpush1.bf16.msra.mxu0 %v732
    %866 = vmatprep.subr.bf16.mxu0 %v736
    %867 = vmatpush1.bf16.msra.mxu0 %v735
    %868 = vmatprep.subr.bf16.mxu0 %v739
    %869 = vmatpush1.bf16.msra.mxu0 %v738
    %870 = vmatprep.subr.bf16.mxu0 %v742
    %871 = vmatpush1.bf16.msra.mxu0 %v741
    %872 = vmatprep.mubr.bf16.mxu0 %v242
    %873 = vmatmul.mubr.bf16.gmra.mrb[0].mxu0 %v241
    %v874 = vpop.f32.mrb[0].mxu0
    %v875 = vadd.f32 %v444, %v874
    %v876 = vpop.f32.mrb[0].mxu0
    %v877 = vadd.f32 %v448, %v876
    %v878 = vpop.f32.mrb[0].mxu0
    %v879 = vpop.f32.mrb[0].mxu0
    %880 = vdwg.mxu0
    %881 = vmatprep.subr.bf16.mxu0 %v745
    %882 = vmatpush1.bf16.msra.mxu0 %v744
    %883 = vmatprep.subr.bf16.mxu0 %v748
    %884 = vmatpush1.bf16.msra.mxu0 %v747
    %885 = vmatprep.subr.bf16.mxu0 %v751
    %886 = vmatpush1.bf16.msra.mxu0 %v750
    %887 = vmatprep.subr.bf16.mxu0 %v754
    %888 = vmatpush1.bf16.msra.mxu0 %v753
    %889 = vmatprep.subr.bf16.mxu0 %v757
    %890 = vmatpush1.bf16.msra.mxu0 %v756
    %891 = vmatprep.subr.bf16.mxu0 %v760
    %892 = vmatpush1.bf16.msra.mxu0 %v759
    %893 = vmatprep.subr.bf16.mxu0 %v763
    %894 = vmatpush1.bf16.msra.mxu0 %v762
    %895 = vmatprep.subr.bf16.mxu0 %v766
    %896 = vmatpush1.bf16.msra.mxu0 %v765
    %897 = vmatprep.subr.bf16.mxu0 0
    %898 = vmatpush1.bf16.msra.mxu0 0
    %899 = vmatprep.subr.bf16.mxu0 0
    %900 = vmatpush1.bf16.msra.mxu0 0
    %901 = vmatprep.subr.bf16.mxu0 0
    %902 = vmatpush1.bf16.msra.mxu0 0
    %903 = vmatprep.subr.bf16.mxu0 0
    %904 = vmatpush1.bf16.msra.mxu0 0
    %905 = vmatprep.subr.bf16.mxu0 0
    %906 = vmatpush1.bf16.msra.mxu0 0
    %907 = vmatprep.subr.bf16.mxu0 0
    %908 = vmatpush1.bf16.msra.mxu0 0
    %909 = vmatprep.subr.bf16.mxu0 0
    %910 = vmatpush1.bf16.msra.mxu0 0
    %911 = vmatprep.subr.bf16.mxu0 0
    %912 = vmatpush1.bf16.msra.mxu0 0
    %913 = vmatprep.mubr.bf16.mxu0 0
    %914 = vmatmul.mubr.bf16.gmra.mrb[0].mxu0 %v243
    %v915 = vpop.f32.mrb[0].mxu0
    %v916 = vadd.f32 %v875, %v915
    %v917 = vpop.f32.mrb[0].mxu0
    %v918 = vadd.f32 %v877, %v917
    %v919 = vpop.f32.mrb[0].mxu0
    %v920 = vpop.f32.mrb[0].mxu0
    %921 = vdwg.mxu0
    %922 = vmatprep.subr.bf16.mxu0 0
    %923 = vmatpush1.bf16.msra.mxu0 %v698
    %924 = vmatprep.subr.bf16.mxu0 0
    %925 = vmatpush1.bf16.msra.mxu0 %v701
    %926 = vmatprep.subr.bf16.mxu0 0
    %927 = vmatpush1.bf16.msra.mxu0 %v704
    %928 = vmatprep.subr.bf16.mxu0 0
    %929 = vmatpush1.bf16.msra.mxu0 %v707
    %930 = vmatprep.subr.bf16.mxu0 0
    %931 = vmatpush1.bf16.msra.mxu0 %v710
    %932 = vmatprep.subr.bf16.mxu0 0
    %933 = vmatpush1.bf16.msra.mxu0 %v713
    %934 = vmatprep.subr.bf16.mxu0 0
    %935 = vmatpush1.bf16.msra.mxu0 %v716
    %936 = vmatprep.subr.bf16.mxu0 0
    %937 = vmatpush1.bf16.msra.mxu0 %v719
    %938 = vmatprep.subr.bf16.mxu0 0
    %939 = vmatpush1.bf16.msra.mxu0 %v722
    %940 = vmatprep.subr.bf16.mxu0 0
    %941 = vmatpush1.bf16.msra.mxu0 %v725
    %942 = vmatprep.subr.bf16.mxu0 0
    %943 = vmatpush1.bf16.msra.mxu0 %v728
    %944 = vmatprep.subr.bf16.mxu0 0
    %945 = vmatpush1.bf16.msra.mxu0 %v731
    %946 = vmatprep.subr.bf16.mxu0 0
    %947 = vmatpush1.bf16.msra.mxu0 %v734
    %948 = vmatprep.subr.bf16.mxu0 0
    %949 = vmatpush1.bf16.msra.mxu0 %v737
    %950 = vmatprep.subr.bf16.mxu0 0
    %951 = vmatpush1.bf16.msra.mxu0 %v740
    %952 = vmatprep.subr.bf16.mxu0 0
    %953 = vmatpush1.bf16.msra.mxu0 %v743
    %954 = vmatprep.mubr.bf16.mxu0 %v242
    %955 = vmatmul.mubr.bf16.gmra.mrb[0].mxu0 %v241
    %v956 = vpop.f32.mrb[0].mxu0
    %v957 = vadd.f32 %v452, %v956
    %v958 = vpop.f32.mrb[0].mxu0
    %v959 = vpop.f32.mrb[0].mxu0
    %v960 = vpop.f32.mrb[0].mxu0
    %961 = vdwg.mxu0
    %962 = vmatprep.subr.bf16.mxu0 0
    %963 = vmatpush1.bf16.msra.mxu0 %v746
    %964 = vmatprep.subr.bf16.mxu0 0
    %965 = vmatpush1.bf16.msra.mxu0 %v749
    %966 = vmatprep.subr.bf16.mxu0 0
    %967 = vmatpush1.bf16.msra.mxu0 %v752
    %968 = vmatprep.subr.bf16.mxu0 0
    %969 = vmatpush1.bf16.msra.mxu0 %v755
    %970 = vmatprep.subr.bf16.mxu0 0
    %971 = vmatpush1.bf16.msra.mxu0 %v758
    %972 = vmatprep.subr.bf16.mxu0 0
    %973 = vmatpush1.bf16.msra.mxu0 %v761
    %974 = vmatprep.subr.bf16.mxu0 0
    %975 = vmatpush1.bf16.msra.mxu0 %v764
    %976 = vmatprep.subr.bf16.mxu0 0
    %977 = vmatpush1.bf16.msra.mxu0 %v767
    %978 = vmatprep.subr.bf16.mxu0 0
    %979 = vmatpush1.bf16.msra.mxu0 0
    %980 = vmatprep.subr.bf16.mxu0 0
    %981 = vmatpush1.bf16.msra.mxu0 0
    %982 = vmatprep.subr.bf16.mxu0 0
    %983 = vmatpush1.bf16.msra.mxu0 0
    %984 = vmatprep.subr.bf16.mxu0 0
    %985 = vmatpush1.bf16.msra.mxu0 0
    %986 = vmatprep.subr.bf16.mxu0 0
    %987 = vmatpush1.bf16.msra.mxu0 0
    %988 = vmatprep.subr.bf16.mxu0 0
    %989 = vmatpush1.bf16.msra.mxu0 0
    %990 = vmatprep.subr.bf16.mxu0 0
    %991 = vmatpush1.bf16.msra.mxu0 0
    %992 = vmatprep.subr.bf16.mxu0 0
    %993 = vmatpush1.bf16.msra.mxu0 0
    %994 = vmatprep.mubr.bf16.mxu0 0
    %995 = vmatmul.mubr.bf16.gmra.mrb[0].mxu0 %v243
    %v996 = vpop.f32.mrb[0].mxu0
    %v997 = vadd.f32 %v957, %v996
    %v998 = vpop.f32.mrb[0].mxu0
    %v999 = vpop.f32.mrb[0].mxu0
    %v1000 = vpop.f32.mrb[0].mxu0
    %1001 = vdwg.mxu0
    %v1002 = vmax.f32 %v916, 0.0
    %v1003 = vmax.f32 %v918, 0.0
    %v1004 = vmax.f32 %v997, 0.0
    %v1005 = vpack.c.bf16 %v1002, %v1002
    %v1006 = vpack.c.bf16 %v1003, %v1003
    %v1007 = vpack.c.bf16 %v1004, %v1004
    %v1008 = vld [vmem:[%s5] sm:$0x7]
    %v1010 = vlaneseq
    %v1011 = vshrl.u32 %v1010, 7
    %v1012 = vsub.s32 0, %v1011
    %v1013 = vrot.slane %v1008, %v1012
    %v1014 = vlaneseq
    %v1015 = vshrl.u32 %v1014, 7
    %v1016 = vsub.s32 1, %v1015
    %v1017 = vrot.slane %v1008, %v1016
    %v1018 = vlaneseq
    %v1019 = vshrl.u32 %v1018, 7
    %v1020 = vsub.s32 2, %v1019
    %v1021 = vrot.slane %v1008, %v1020
    %v1121 = vunpack.c.l.b16 %v343
    %v1122 = vunpack.c.h.b16 %v343
    %v1123 = vunpack.c.l.b16 %v344
    %v1124 = vunpack.c.l.b16 %v345
    %v1125 = vunpack.c.h.b16 %v345
    %v1126 = vunpack.c.l.b16 %v346
    %v1127 = vunpack.c.l.b16 %v347
    %v1128 = vunpack.c.h.b16 %v347
    %v1129 = vunpack.c.l.b16 %v348
    %v1130 = vunpack.c.l.b16 %v349
    %v1131 = vunpack.c.h.b16 %v349
    %v1132 = vunpack.c.l.b16 %v350
    %v1133 = vunpack.c.l.b16 %v351
    %v1134 = vunpack.c.h.b16 %v351
    %v1135 = vunpack.c.l.b16 %v352
    %v1136 = vunpack.c.l.b16 %v353
    %v1137 = vunpack.c.h.b16 %v353
    %v1138 = vunpack.c.l.b16 %v354
    %v1139 = vunpack.c.l.b16 %v355
    %v1140 = vunpack.c.h.b16 %v355
    %v1141 = vunpack.c.l.b16 %v356
    %v1142 = vunpack.c.l.b16 %v357
    %v1143 = vunpack.c.h.b16 %v357
    %v1144 = vunpack.c.l.b16 %v358
    %v1145 = vunpack.c.l.b16 %v359
    %v1146 = vunpack.c.h.b16 %v359
    %v1147 = vunpack.c.l.b16 %v360
    %v1148 = vunpack.c.l.b16 %v361
    %v1149 = vunpack.c.h.b16 %v361
    %v1150 = vunpack.c.l.b16 %v362
    %v1151 = vunpack.c.l.b16 %v363
    %v1152 = vunpack.c.h.b16 %v363
    %v1153 = vunpack.c.l.b16 %v364
    %v1154 = vunpack.c.l.b16 %v365
    %v1155 = vunpack.c.h.b16 %v365
    %v1156 = vunpack.c.l.b16 %v366
    %v1157 = vunpack.c.l.b16 %v367
    %v1158 = vunpack.c.h.b16 %v367
    %v1159 = vunpack.c.l.b16 %v368
    %v1160 = vunpack.c.l.b16 %v369
    %v1161 = vunpack.c.h.b16 %v369
    %v1162 = vunpack.c.l.b16 %v370
    %v1163 = vunpack.c.l.b16 %v371
    %v1164 = vunpack.c.h.b16 %v371
    %v1165 = vunpack.c.l.b16 %v372
    %v1166 = vunpack.c.l.b16 %v373
    %v1167 = vunpack.c.h.b16 %v373
    %v1168 = vunpack.c.l.b16 %v374
    %v1169 = vunpack.c.l.b16 %v375
    %v1170 = vunpack.c.h.b16 %v375
    %v1171 = vunpack.c.l.b16 %v376
    %v1172 = vunpack.c.l.b16 %v377
    %v1173 = vunpack.c.h.b16 %v377
    %v1174 = vunpack.c.l.b16 %v378
    %v1175 = vunpack.c.l.b16 %v379
    %v1176 = vunpack.c.h.b16 %v379
    %v1177 = vunpack.c.l.b16 %v380
    %v1178 = vunpack.c.l.b16 %v381
    %v1179 = vunpack.c.h.b16 %v381
    %v1180 = vunpack.c.l.b16 %v382
    %v1181 = vunpack.c.l.b16 %v383
    %v1182 = vunpack.c.h.b16 %v383
    %v1183 = vunpack.c.l.b16 %v384
    %v1184 = vunpack.c.l.b16 %v385
    %v1185 = vunpack.c.h.b16 %v385
    %v1186 = vunpack.c.l.b16 %v386
    %v1187 = vunpack.c.l.b16 %v387
    %v1188 = vunpack.c.h.b16 %v387
    %v1189 = vunpack.c.l.b16 %v388
    %v1190 = vunpack.c.l.b16 %v389
    %v1191 = vunpack.c.h.b16 %v389
    %v1192 = vunpack.c.l.b16 %v390
    %v1193 = vunpack.c.l.b16 %v391
    %v1194 = vunpack.c.h.b16 %v391
    %v1195 = vunpack.c.l.b16 %v392
    %v1196 = vunpack.c.l.b16 %v393
    %v1197 = vunpack.c.h.b16 %v393
    %v1198 = vunpack.c.l.b16 %v394
    %v1199 = vunpack.c.l.b16 %v395
    %v1200 = vunpack.c.h.b16 %v395
    %v1201 = vunpack.c.l.b16 %v396
    %v1202 = vunpack.c.l.b16 %v397
    %v1203 = vunpack.c.h.b16 %v397
    %v1204 = vunpack.c.l.b16 %v398
    %v1205 = vunpack.c.l.b16 %v399
    %v1206 = vunpack.c.h.b16 %v399
    %v1207 = vunpack.c.l.b16 %v400
    %v1208 = vunpack.c.l.b16 %v401
    %v1209 = vunpack.c.h.b16 %v401
    %v1210 = vunpack.c.l.b16 %v402
    %v1211 = vunpack.c.l.b16 %v403
    %v1212 = vunpack.c.h.b16 %v403
    %v1213 = vunpack.c.l.b16 %v404
    %v1214 = vunpack.c.l.b16 %v405
    %v1215 = vunpack.c.h.b16 %v405
    %v1216 = vunpack.c.l.b16 %v406
    %v1217 = vunpack.c.l.b16 %v407
    %v1218 = vunpack.c.h.b16 %v407
    %v1219 = vunpack.c.l.b16 %v408
    %v1220 = vunpack.c.l.b16 %v409
    %v1221 = vunpack.c.h.b16 %v409
    %v1222 = vunpack.c.l.b16 %v410
    %v1223 = vunpack.c.l.b16 %v411
    %v1224 = vunpack.c.h.b16 %v411
    %v1225 = vunpack.c.l.b16 %v412
    %v1226 = vunpack.c.l.b16 %v413
    %v1227 = vunpack.c.h.b16 %v413
    %v1228 = vunpack.c.l.b16 %v414
    %v1229 = vunpack.c.l.b16 %v415
    %v1230 = vunpack.c.h.b16 %v415
    %v1231 = vunpack.c.l.b16 %v416
    %v1232 = vunpack.c.l.b16 %v417
    %v1233 = vunpack.c.h.b16 %v417
    %v1234 = vunpack.c.l.b16 %v418
    %v1235 = vunpack.c.l.b16 %v419
    %v1236 = vunpack.c.h.b16 %v419
    %v1237 = vunpack.c.l.b16 %v420
    %v1238 = vunpack.c.l.b16 %v421
    %v1239 = vunpack.c.h.b16 %v421
    %v1240 = vunpack.c.l.b16 %v422
    %v1241 = vunpack.c.l.b16 %v423
    %v1242 = vunpack.c.h.b16 %v423
    %v1243 = vunpack.c.l.b16 %v424
    %v1244 = vunpack.c.l.b16 %v425
    %v1245 = vunpack.c.h.b16 %v425
    %v1246 = vunpack.c.l.b16 %v426
    %v1247 = vunpack.c.l.b16 %v427
    %v1248 = vunpack.c.h.b16 %v427
    %v1249 = vunpack.c.l.b16 %v428
    %v1250 = vunpack.c.l.b16 %v429
    %v1251 = vunpack.c.h.b16 %v429
    %v1252 = vunpack.c.l.b16 %v430
    %v1253 = vunpack.c.l.b16 %v431
    %v1254 = vunpack.c.h.b16 %v431
    %v1255 = vunpack.c.l.b16 %v432
    %v1256 = vunpack.c.l.b16 %v433
    %v1257 = vunpack.c.h.b16 %v433
    %v1258 = vunpack.c.l.b16 %v434
    %v1259 = vunpack.c.l.b16 %v435
    %v1260 = vunpack.c.h.b16 %v435
    %v1261 = vunpack.c.l.b16 %v436
    %v1262 = vunpack.c.l.b16 %v437
    %v1263 = vunpack.c.h.b16 %v437
    %v1264 = vunpack.c.l.b16 %v438
    %v1265 = vpack.c.b16 %v1124, %v1121
    %v1266 = vpack.c.b16 %v1125, %v1122
    %v1267 = vpack.c.b16 %v1126, %v1123
    %v1268 = vpack.c.b16 %v1130, %v1127
    %v1269 = vpack.c.b16 %v1131, %v1128
    %v1270 = vpack.c.b16 %v1132, %v1129
    %v1271 = vpack.c.b16 %v1136, %v1133
    %v1272 = vpack.c.b16 %v1137, %v1134
    %v1273 = vpack.c.b16 %v1138, %v1135
    %v1274 = vpack.c.b16 %v1142, %v1139
    %v1275 = vpack.c.b16 %v1143, %v1140
    %v1276 = vpack.c.b16 %v1144, %v1141
    %v1277 = vpack.c.b16 %v1148, %v1145
    %v1278 = vpack.c.b16 %v1149, %v1146
    %v1279 = vpack.c.b16 %v1150, %v1147
    %v1280 = vpack.c.b16 %v1154, %v1151
    %v1281 = vpack.c.b16 %v1155, %v1152
    %v1282 = vpack.c.b16 %v1156, %v1153
    %v1283 = vpack.c.b16 %v1160, %v1157
    %v1284 = vpack.c.b16 %v1161, %v1158
    %v1285 = vpack.c.b16 %v1162, %v1159
    %v1286 = vpack.c.b16 %v1166, %v1163
    %v1287 = vpack.c.b16 %v1167, %v1164
    %v1288 = vpack.c.b16 %v1168, %v1165
    %v1289 = vpack.c.b16 %v1172, %v1169
    %v1290 = vpack.c.b16 %v1173, %v1170
    %v1291 = vpack.c.b16 %v1174, %v1171
    %v1292 = vpack.c.b16 %v1178, %v1175
    %v1293 = vpack.c.b16 %v1179, %v1176
    %v1294 = vpack.c.b16 %v1180, %v1177
    %v1295 = vpack.c.b16 %v1184, %v1181
    %v1296 = vpack.c.b16 %v1185, %v1182
    %v1297 = vpack.c.b16 %v1186, %v1183
    %v1298 = vpack.c.b16 %v1190, %v1187
    %v1299 = vpack.c.b16 %v1191, %v1188
    %v1300 = vpack.c.b16 %v1192, %v1189
    %v1301 = vpack.c.b16 %v1196, %v1193
    %v1302 = vpack.c.b16 %v1197, %v1194
    %v1303 = vpack.c.b16 %v1198, %v1195
    %v1304 = vpack.c.b16 %v1202, %v1199
    %v1305 = vpack.c.b16 %v1203, %v1200
    %v1306 = vpack.c.b16 %v1204, %v1201
    %v1307 = vpack.c.b16 %v1208, %v1205
    %v1308 = vpack.c.b16 %v1209, %v1206
    %v1309 = vpack.c.b16 %v1210, %v1207
    %v1310 = vpack.c.b16 %v1214, %v1211
    %v1311 = vpack.c.b16 %v1215, %v1212
    %v1312 = vpack.c.b16 %v1216, %v1213
    %v1313 = vpack.c.b16 %v1220, %v1217
    %v1314 = vpack.c.b16 %v1221, %v1218
    %v1315 = vpack.c.b16 %v1222, %v1219
    %v1316 = vpack.c.b16 %v1226, %v1223
    %v1317 = vpack.c.b16 %v1227, %v1224
    %v1318 = vpack.c.b16 %v1228, %v1225
    %v1319 = vpack.c.b16 %v1232, %v1229
    %v1320 = vpack.c.b16 %v1233, %v1230
    %v1321 = vpack.c.b16 %v1234, %v1231
    %v1322 = vpack.c.b16 %v1238, %v1235
    %v1323 = vpack.c.b16 %v1239, %v1236
    %v1324 = vpack.c.b16 %v1240, %v1237
    %v1325 = vpack.c.b16 %v1244, %v1241
    %v1326 = vpack.c.b16 %v1245, %v1242
    %v1327 = vpack.c.b16 %v1246, %v1243
    %v1328 = vpack.c.b16 %v1250, %v1247
    %v1329 = vpack.c.b16 %v1251, %v1248
    %v1330 = vpack.c.b16 %v1252, %v1249
    %v1331 = vpack.c.b16 %v1256, %v1253
    %v1332 = vpack.c.b16 %v1257, %v1254
    %v1333 = vpack.c.b16 %v1258, %v1255
    %v1334 = vpack.c.b16 %v1262, %v1259
    %v1335 = vpack.c.b16 %v1263, %v1260
    %v1336 = vpack.c.b16 %v1264, %v1261
    %1409 = vmatprep.subr.bf16.mxu0 %v1266
    %1410 = vmatpush1.bf16.msra.mxu0 %v1265
    %1411 = vmatprep.subr.bf16.mxu0 %v1269
    %1412 = vmatpush1.bf16.msra.mxu0 %v1268
    %1413 = vmatprep.subr.bf16.mxu0 %v1272
    %1414 = vmatpush1.bf16.msra.mxu0 %v1271
    %1415 = vmatprep.subr.bf16.mxu0 %v1275
    %1416 = vmatpush1.bf16.msra.mxu0 %v1274
    %1417 = vmatprep.subr.bf16.mxu0 %v1278
    %1418 = vmatpush1.bf16.msra.mxu0 %v1277
    %1419 = vmatprep.subr.bf16.mxu0 %v1281
    %1420 = vmatpush1.bf16.msra.mxu0 %v1280
    %1421 = vmatprep.subr.bf16.mxu0 %v1284
    %1422 = vmatpush1.bf16.msra.mxu0 %v1283
    %1423 = vmatprep.subr.bf16.mxu0 %v1287
    %1424 = vmatpush1.bf16.msra.mxu0 %v1286
    %1425 = vmatprep.subr.bf16.mxu0 %v1290
    %1426 = vmatpush1.bf16.msra.mxu0 %v1289
    %1427 = vmatprep.subr.bf16.mxu0 %v1293
    %1428 = vmatpush1.bf16.msra.mxu0 %v1292
    %1429 = vmatprep.subr.bf16.mxu0 %v1296
    %1430 = vmatpush1.bf16.msra.mxu0 %v1295
    %1431 = vmatprep.subr.bf16.mxu0 %v1299
    %1432 = vmatpush1.bf16.msra.mxu0 %v1298
    %1433 = vmatprep.subr.bf16.mxu0 %v1302
    %1434 = vmatpush1.bf16.msra.mxu0 %v1301
    %1435 = vmatprep.subr.bf16.mxu0 %v1305
    %1436 = vmatpush1.bf16.msra.mxu0 %v1304
    %1437 = vmatprep.subr.bf16.mxu0 %v1308
    %1438 = vmatpush1.bf16.msra.mxu0 %v1307
    %1439 = vmatprep.subr.bf16.mxu0 %v1311
    %1440 = vmatpush1.bf16.msra.mxu0 %v1310
    %1441 = vmatprep.mubr.bf16.mxu0 %v245
    %1442 = vmatmul.mubr.bf16.gmra.mrb[0].mxu0 %v244
    %v1443 = vpop.f32.mrb[0].mxu0
    %v1444 = vadd.f32 %v1013, %v1443
    %v1445 = vpop.f32.mrb[0].mxu0
    %v1446 = vadd.f32 %v1017, %v1445
    %v1447 = vpop.f32.mrb[0].mxu0
    %v1448 = vpop.f32.mrb[0].mxu0
    %1449 = vdwg.mxu0
    %1450 = vmatprep.subr.bf16.mxu0 %v1314
    %1451 = vmatpush1.bf16.msra.mxu0 %v1313
    %1452 = vmatprep.subr.bf16.mxu0 %v1317
    %1453 = vmatpush1.bf16.msra.mxu0 %v1316
    %1454 = vmatprep.subr.bf16.mxu0 %v1320
    %1455 = vmatpush1.bf16.msra.mxu0 %v1319
    %1456 = vmatprep.subr.bf16.mxu0 %v1323
    %1457 = vmatpush1.bf16.msra.mxu0 %v1322
    %1458 = vmatprep.subr.bf16.mxu0 %v1326
    %1459 = vmatpush1.bf16.msra.mxu0 %v1325
    %1460 = vmatprep.subr.bf16.mxu0 %v1329
    %1461 = vmatpush1.bf16.msra.mxu0 %v1328
    %1462 = vmatprep.subr.bf16.mxu0 %v1332
    %1463 = vmatpush1.bf16.msra.mxu0 %v1331
    %1464 = vmatprep.subr.bf16.mxu0 %v1335
    %1465 = vmatpush1.bf16.msra.mxu0 %v1334
    %1466 = vmatprep.subr.bf16.mxu0 0
    %1467 = vmatpush1.bf16.msra.mxu0 0
    %1468 = vmatprep.subr.bf16.mxu0 0
    %1469 = vmatpush1.bf16.msra.mxu0 0
    %1470 = vmatprep.subr.bf16.mxu0 0
    %1471 = vmatpush1.bf16.msra.mxu0 0
    %1472 = vmatprep.subr.bf16.mxu0 0
    %1473 = vmatpush1.bf16.msra.mxu0 0
    %1474 = vmatprep.subr.bf16.mxu0 0
    %1475 = vmatpush1.bf16.msra.mxu0 0
    %1476 = vmatprep.subr.bf16.mxu0 0
    %1477 = vmatpush1.bf16.msra.mxu0 0
    %1478 = vmatprep.subr.bf16.mxu0 0
    %1479 = vmatpush1.bf16.msra.mxu0 0
    %1480 = vmatprep.subr.bf16.mxu0 0
    %1481 = vmatpush1.bf16.msra.mxu0 0
    %1482 = vmatprep.mubr.bf16.mxu0 0
    %1483 = vmatmul.mubr.bf16.gmra.mrb[0].mxu0 %v246
    %v1484 = vpop.f32.mrb[0].mxu0
    %v1485 = vadd.f32 %v1444, %v1484
    %v1486 = vpop.f32.mrb[0].mxu0
    %v1487 = vadd.f32 %v1446, %v1486
    %v1488 = vpop.f32.mrb[0].mxu0
    %v1489 = vpop.f32.mrb[0].mxu0
    %1490 = vdwg.mxu0
    %1491 = vmatprep.subr.bf16.mxu0 0
    %1492 = vmatpush1.bf16.msra.mxu0 %v1267
    %1493 = vmatprep.subr.bf16.mxu0 0
    %1494 = vmatpush1.bf16.msra.mxu0 %v1270
    %1495 = vmatprep.subr.bf16.mxu0 0
    %1496 = vmatpush1.bf16.msra.mxu0 %v1273
    %1497 = vmatprep.subr.bf16.mxu0 0
    %1498 = vmatpush1.bf16.msra.mxu0 %v1276
    %1499 = vmatprep.subr.bf16.mxu0 0
    %1500 = vmatpush1.bf16.msra.mxu0 %v1279
    %1501 = vmatprep.subr.bf16.mxu0 0
    %1502 = vmatpush1.bf16.msra.mxu0 %v1282
    %1503 = vmatprep.subr.bf16.mxu0 0
    %1504 = vmatpush1.bf16.msra.mxu0 %v1285
    %1505 = vmatprep.subr.bf16.mxu0 0
    %1506 = vmatpush1.bf16.msra.mxu0 %v1288
    %1507 = vmatprep.subr.bf16.mxu0 0
    %1508 = vmatpush1.bf16.msra.mxu0 %v1291
    %1509 = vmatprep.subr.bf16.mxu0 0
    %1510 = vmatpush1.bf16.msra.mxu0 %v1294
    %1511 = vmatprep.subr.bf16.mxu0 0
    %1512 = vmatpush1.bf16.msra.mxu0 %v1297
    %1513 = vmatprep.subr.bf16.mxu0 0
    %1514 = vmatpush1.bf16.msra.mxu0 %v1300
    %1515 = vmatprep.subr.bf16.mxu0 0
    %1516 = vmatpush1.bf16.msra.mxu0 %v1303
    %1517 = vmatprep.subr.bf16.mxu0 0
    %1518 = vmatpush1.bf16.msra.mxu0 %v1306
    %1519 = vmatprep.subr.bf16.mxu0 0
    %1520 = vmatpush1.bf16.msra.mxu0 %v1309
    %1521 = vmatprep.subr.bf16.mxu0 0
    %1522 = vmatpush1.bf16.msra.mxu0 %v1312
    %1523 = vmatprep.mubr.bf16.mxu0 %v245
    %1524 = vmatmul.mubr.bf16.gmra.mrb[0].mxu0 %v244
    %v1525 = vpop.f32.mrb[0].mxu0
    %v1526 = vadd.f32 %v1021, %v1525
    %v1527 = vpop.f32.mrb[0].mxu0
    %v1528 = vpop.f32.mrb[0].mxu0
    %v1529 = vpop.f32.mrb[0].mxu0
    %1530 = vdwg.mxu0
    %1531 = vmatprep.subr.bf16.mxu0 0
    %1532 = vmatpush1.bf16.msra.mxu0 %v1315
    %1533 = vmatprep.subr.bf16.mxu0 0
    %1534 = vmatpush1.bf16.msra.mxu0 %v1318
    %1535 = vmatprep.subr.bf16.mxu0 0
    %1536 = vmatpush1.bf16.msra.mxu0 %v1321
    %1537 = vmatprep.subr.bf16.mxu0 0
    %1538 = vmatpush1.bf16.msra.mxu0 %v1324
    %1539 = vmatprep.subr.bf16.mxu0 0
    %1540 = vmatpush1.bf16.msra.mxu0 %v1327
    %1541 = vmatprep.subr.bf16.mxu0 0
    %1542 = vmatpush1.bf16.msra.mxu0 %v1330
    %1543 = vmatprep.subr.bf16.mxu0 0
    %1544 = vmatpush1.bf16.msra.mxu0 %v1333
    %1545 = vmatprep.subr.bf16.mxu0 0
    %1546 = vmatpush1.bf16.msra.mxu0 %v1336
    %1547 = vmatprep.subr.bf16.mxu0 0
    %1548 = vmatpush1.bf16.msra.mxu0 0
    %1549 = vmatprep.subr.bf16.mxu0 0
    %1550 = vmatpush1.bf16.msra.mxu0 0
    %1551 = vmatprep.subr.bf16.mxu0 0
    %1552 = vmatpush1.bf16.msra.mxu0 0
    %1553 = vmatprep.subr.bf16.mxu0 0
    %1554 = vmatpush1.bf16.msra.mxu0 0
    %1555 = vmatprep.subr.bf16.mxu0 0
    %1556 = vmatpush1.bf16.msra.mxu0 0
    %1557 = vmatprep.subr.bf16.mxu0 0
    %1558 = vmatpush1.bf16.msra.mxu0 0
    %1559 = vmatprep.subr.bf16.mxu0 0
    %1560 = vmatpush1.bf16.msra.mxu0 0
    %1561 = vmatprep.subr.bf16.mxu0 0
    %1562 = vmatpush1.bf16.msra.mxu0 0
    %1563 = vmatprep.mubr.bf16.mxu0 0
    %1564 = vmatmul.mubr.bf16.gmra.mrb[0].mxu0 %v246
    %v1565 = vpop.f32.mrb[0].mxu0
    %v1566 = vadd.f32 %v1526, %v1565
    %v1567 = vpop.f32.mrb[0].mxu0
    %v1568 = vpop.f32.mrb[0].mxu0
    %v1569 = vpop.f32.mrb[0].mxu0
    %1570 = vdwg.mxu0
    %v1571 = vmax.f32 %v1485, 0.0
    %v1572 = vmax.f32 %v1487, 0.0
    %v1573 = vmax.f32 %v1566, 0.0
    %v1574 = vpack.c.bf16 %v1571, %v1571
    %v1575 = vpack.c.bf16 %v1572, %v1572
    %v1576 = vpack.c.bf16 %v1573, %v1573
    %v1577 = vld [vmem:[#allocation6] sm:$0xf]
    %v1578 = vld [vmem:[#allocation6 + $0x4] sm:$0xf]
    %v1579 = vld [vmem:[#allocation6 + $0x8] sm:$0xf]
    %v1580 = vld [vmem:[#allocation6 + $0xc] sm:$0xf]
    %v1581 = vld [vmem:[#allocation6 + $0x10] sm:$0xf]
    %v1582 = vld [vmem:[#allocation6 + $0x14] sm:$0xf]
    %v1583 = vld [vmem:[#allocation6 + $0x18] sm:$0xf]
    %v1584 = vld [vmem:[#allocation6 + $0x1c] sm:$0xf]
    %v1585 = vld [vmem:[#allocation6 + $0x20] sm:$0xf]
    %v1586 = vld [vmem:[#allocation6 + $0x24] sm:$0xf]
    %v1587 = vld [vmem:[#allocation6 + $0x28] sm:$0xf]
    %v1588 = vld [vmem:[#allocation6 + $0x2c] sm:$0xf]
    %v1589 = vld [vmem:[#allocation6 + $0x30] sm:$0xf]
    %v1590 = vld [vmem:[#allocation6 + $0x34] sm:$0xf]
    %v1591 = vld [vmem:[#allocation6 + $0x38] sm:$0xf]
    %v1592 = vld [vmem:[#allocation6 + $0x3c] sm:$0xf]
    %v1593 = vld [vmem:[#allocation6 + $0x40] sm:$0xf]
    %v1594 = vld [vmem:[#allocation6 + $0x44] sm:$0xf]
    %v1595 = vld [vmem:[#allocation6 + $0x48] sm:$0xf]
    %v1596 = vld [vmem:[#allocation6 + $0x4c] sm:$0xf]
    %v1597 = vld [vmem:[#allocation6 + $0x50] sm:$0xf]
    %v1598 = vld [vmem:[#allocation6 + $0x54] sm:$0xf]
    %v1599 = vld [vmem:[#allocation6 + $0x58] sm:$0xf]
    %v1600 = vld [vmem:[#allocation6 + $0x5c] sm:$0xf]
    %v1601 = vld [vmem:[#allocation6 + $0x60] sm:$0xf]
    %v1602 = vld [vmem:[#allocation6 + $0x64] sm:$0xf]
    %v1603 = vld [vmem:[#allocation6 + $0x68] sm:$0xf]
    %v1604 = vld [vmem:[#allocation6 + $0x6c] sm:$0xf]
    %v1605 = vld [vmem:[#allocation6 + $0x70] sm:$0xf]
    %v1606 = vld [vmem:[#allocation6 + $0x74] sm:$0xf]
    %v1607 = vld [vmem:[#allocation6 + $0x78] sm:$0xf]
    %v1608 = vld [vmem:[#allocation6 + $0x7c] sm:$0xf]
    %v1609 = vld [vmem:[#allocation6 + $0x80] sm:$0xf]
    %v1610 = vld [vmem:[#allocation6 + $0x84] sm:$0xf]
    %v1611 = vld [vmem:[#allocation6 + $0x88] sm:$0xf]
    %v1612 = vld [vmem:[#allocation6 + $0x8c] sm:$0xf]
    %v1613 = vld [vmem:[#allocation6 + $0x90] sm:$0xf]
    %v1614 = vld [vmem:[#allocation6 + $0x94] sm:$0xf]
    %v1615 = vld [vmem:[#allocation6 + $0x98] sm:$0xf]
    %v1616 = vld [vmem:[#allocation6 + $0x9c] sm:$0xf]
    %v1617 = vld [vmem:[#allocation6 + $0xa0] sm:$0xf]
    %v1618 = vld [vmem:[#allocation6 + $0xa4] sm:$0xf]
    %v1619 = vld [vmem:[#allocation6 + $0xa8] sm:$0xf]
    %v1620 = vld [vmem:[#allocation6 + $0xac] sm:$0xf]
    %v1621 = vld [vmem:[#allocation6 + $0xb0] sm:$0xf]
    %v1622 = vld [vmem:[#allocation6 + $0xb4] sm:$0xf]
    %v1623 = vld [vmem:[#allocation6 + $0xb8] sm:$0xf]
    %v1624 = vld [vmem:[#allocation6 + $0xbc] sm:$0xf]
    %v1625 = vld [vmem:[#allocation6 + $0xc0] sm:$0xf]
    %v1626 = vld [vmem:[#allocation6 + $0xc4] sm:$0xf]
    %v1627 = vld [vmem:[#allocation6 + $0xc8] sm:$0xf]
    %v1628 = vld [vmem:[#allocation6 + $0xcc] sm:$0xf]
    %v1629 = vld [vmem:[#allocation6 + $0xd0] sm:$0xf]
    %v1630 = vld [vmem:[#allocation6 + $0xd4] sm:$0xf]
    %v1631 = vld [vmem:[#allocation6 + $0xd8] sm:$0xf]
    %v1632 = vld [vmem:[#allocation6 + $0xdc] sm:$0xf]
    %v1633 = vld [vmem:[#allocation6 + $0xe0] sm:$0xf]
    %v1634 = vld [vmem:[#allocation6 + $0xe4] sm:$0xf]
    %v1635 = vld [vmem:[#allocation6 + $0xe8] sm:$0xf]
    %v1636 = vld [vmem:[#allocation6 + $0xec] sm:$0xf]
    %v1637 = vld [vmem:[#allocation6 + $0xf0] sm:$0xf]
    %v1638 = vld [vmem:[#allocation6 + $0xf4] sm:$0xf]
    %v1639 = vld [vmem:[#allocation6 + $0xf8] sm:$0xf]
    %v1640 = vld [vmem:[#allocation6 + $0xfc] sm:$0xf]
    %v1641 = vld [vmem:[#allocation6 + $0x100] sm:$0xf]
    %v1642 = vld [vmem:[#allocation6 + $0x104] sm:$0xf]
    %v1643 = vld [vmem:[#allocation6 + $0x108] sm:$0xf]
    %v1644 = vld [vmem:[#allocation6 + $0x10c] sm:$0xf]
    %v1645 = vld [vmem:[#allocation6 + $0x110] sm:$0xf]
    %v1646 = vld [vmem:[#allocation6 + $0x114] sm:$0xf]
    %v1647 = vld [vmem:[#allocation6 + $0x118] sm:$0xf]
    %v1648 = vld [vmem:[#allocation6 + $0x11c] sm:$0xf]
    %v1649 = vld [vmem:[#allocation6 + $0x120] sm:$0xf]
    %v1650 = vld [vmem:[#allocation6 + $0x124] sm:$0xf]
    %v1651 = vld [vmem:[#allocation6 + $0x128] sm:$0xf]
    %v1652 = vld [vmem:[#allocation6 + $0x12c] sm:$0xf]
    %v1653 = vld [vmem:[#allocation6 + $0x130] sm:$0xf]
    %v1654 = vld [vmem:[#allocation6 + $0x134] sm:$0xf]
    %v1655 = vld [vmem:[#allocation6 + $0x138] sm:$0xf]
    %v1656 = vld [vmem:[#allocation6 + $0x13c] sm:$0xf]
    %v1657 = vld [vmem:[#allocation6 + $0x140] sm:$0xf]
    %v1658 = vld [vmem:[#allocation6 + $0x144] sm:$0xf]
    %v1659 = vld [vmem:[#allocation6 + $0x148] sm:$0xf]
    %v1660 = vld [vmem:[#allocation6 + $0x14c] sm:$0xf]
    %v1661 = vld [vmem:[#allocation6 + $0x150] sm:$0xf]
    %v1662 = vld [vmem:[#allocation6 + $0x154] sm:$0xf]
    %v1663 = vld [vmem:[#allocation6 + $0x158] sm:$0xf]
    %v1664 = vld [vmem:[#allocation6 + $0x15c] sm:$0xf]
    %v1665 = vld [vmem:[#allocation6 + $0x160] sm:$0xf]
    %v1666 = vld [vmem:[#allocation6 + $0x164] sm:$0xf]
    %v1667 = vld [vmem:[#allocation6 + $0x168] sm:$0xf]
    %v1668 = vld [vmem:[#allocation6 + $0x16c] sm:$0xf]
    %v1669 = vld [vmem:[#allocation6 + $0x170] sm:$0xf]
    %v1670 = vld [vmem:[#allocation6 + $0x174] sm:$0xf]
    %v1671 = vld [vmem:[#allocation6 + $0x178] sm:$0xf]
    %v1672 = vld [vmem:[#allocation6 + $0x17c] sm:$0xf]
    %v1673 = vld [vmem:[%s7] sm:$0x1]
    %v1675 = vlaneseq
    %v1676 = vshrl.u32 %v1675, 7
    %v1677 = vsub.s32 0, %v1676
    %v1678 = vrot.slane %v1673, %v1677
    %v1776 = vunpack.c.l.b16 %v1577
    %v1777 = vunpack.c.l.b16 %v1578
    %v1778 = vunpack.c.l.b16 %v1579
    %v1779 = vunpack.c.l.b16 %v1580
    %v1780 = vunpack.c.l.b16 %v1581
    %v1781 = vunpack.c.l.b16 %v1582
    %v1782 = vunpack.c.l.b16 %v1583
    %v1783 = vunpack.c.l.b16 %v1584
    %v1784 = vunpack.c.l.b16 %v1585
    %v1785 = vunpack.c.l.b16 %v1586
    %v1786 = vunpack.c.l.b16 %v1587
    %v1787 = vunpack.c.l.b16 %v1588
    %v1788 = vunpack.c.l.b16 %v1589
    %v1789 = vunpack.c.l.b16 %v1590
    %v1790 = vunpack.c.l.b16 %v1591
    %v1791 = vunpack.c.l.b16 %v1592
    %v1792 = vunpack.c.l.b16 %v1593
    %v1793 = vunpack.c.l.b16 %v1594
    %v1794 = vunpack.c.l.b16 %v1595
    %v1795 = vunpack.c.l.b16 %v1596
    %v1796 = vunpack.c.l.b16 %v1597
    %v1797 = vunpack.c.l.b16 %v1598
    %v1798 = vunpack.c.l.b16 %v1599
    %v1799 = vunpack.c.l.b16 %v1600
    %v1800 = vunpack.c.l.b16 %v1601
    %v1801 = vunpack.c.l.b16 %v1602
    %v1802 = vunpack.c.l.b16 %v1603
    %v1803 = vunpack.c.l.b16 %v1604
    %v1804 = vunpack.c.l.b16 %v1605
    %v1805 = vunpack.c.l.b16 %v1606
    %v1806 = vunpack.c.l.b16 %v1607
    %v1807 = vunpack.c.l.b16 %v1608
    %v1808 = vunpack.c.l.b16 %v1609
    %v1809 = vunpack.c.l.b16 %v1610
    %v1810 = vunpack.c.l.b16 %v1611
    %v1811 = vunpack.c.l.b16 %v1612
    %v1812 = vunpack.c.l.b16 %v1613
    %v1813 = vunpack.c.l.b16 %v1614
    %v1814 = vunpack.c.l.b16 %v1615
    %v1815 = vunpack.c.l.b16 %v1616
    %v1816 = vunpack.c.l.b16 %v1617
    %v1817 = vunpack.c.l.b16 %v1618
    %v1818 = vunpack.c.l.b16 %v1619
    %v1819 = vunpack.c.l.b16 %v1620
    %v1820 = vunpack.c.l.b16 %v1621
    %v1821 = vunpack.c.l.b16 %v1622
    %v1822 = vunpack.c.l.b16 %v1623
    %v1823 = vunpack.c.l.b16 %v1624
    %v1824 = vunpack.c.l.b16 %v1625
    %v1825 = vunpack.c.l.b16 %v1626
    %v1826 = vunpack.c.l.b16 %v1627
    %v1827 = vunpack.c.l.b16 %v1628
    %v1828 = vunpack.c.l.b16 %v1629
    %v1829 = vunpack.c.l.b16 %v1630
    %v1830 = vunpack.c.l.b16 %v1631
    %v1831 = vunpack.c.l.b16 %v1632
    %v1832 = vunpack.c.l.b16 %v1633
    %v1833 = vunpack.c.l.b16 %v1634
    %v1834 = vunpack.c.l.b16 %v1635
    %v1835 = vunpack.c.l.b16 %v1636
    %v1836 = vunpack.c.l.b16 %v1637
    %v1837 = vunpack.c.l.b16 %v1638
    %v1838 = vunpack.c.l.b16 %v1639
    %v1839 = vunpack.c.l.b16 %v1640
    %v1840 = vunpack.c.l.b16 %v1641
    %v1841 = vunpack.c.l.b16 %v1642
    %v1842 = vunpack.c.l.b16 %v1643
    %v1843 = vunpack.c.l.b16 %v1644
    %v1844 = vunpack.c.l.b16 %v1645
    %v1845 = vunpack.c.l.b16 %v1646
    %v1846 = vunpack.c.l.b16 %v1647
    %v1847 = vunpack.c.l.b16 %v1648
    %v1848 = vunpack.c.l.b16 %v1649
    %v1849 = vunpack.c.l.b16 %v1650
    %v1850 = vunpack.c.l.b16 %v1651
    %v1851 = vunpack.c.l.b16 %v1652
    %v1852 = vunpack.c.l.b16 %v1653
    %v1853 = vunpack.c.l.b16 %v1654
    %v1854 = vunpack.c.l.b16 %v1655
    %v1855 = vunpack.c.l.b16 %v1656
    %v1856 = vunpack.c.l.b16 %v1657
    %v1857 = vunpack.c.l.b16 %v1658
    %v1858 = vunpack.c.l.b16 %v1659
    %v1859 = vunpack.c.l.b16 %v1660
    %v1860 = vunpack.c.l.b16 %v1661
    %v1861 = vunpack.c.l.b16 %v1662
    %v1862 = vunpack.c.l.b16 %v1663
    %v1863 = vunpack.c.l.b16 %v1664
    %v1864 = vunpack.c.l.b16 %v1665
    %v1865 = vunpack.c.l.b16 %v1666
    %v1866 = vunpack.c.l.b16 %v1667
    %v1867 = vunpack.c.l.b16 %v1668
    %v1868 = vunpack.c.l.b16 %v1669
    %v1869 = vunpack.c.l.b16 %v1670
    %v1870 = vunpack.c.l.b16 %v1671
    %v1871 = vunpack.c.l.b16 %v1672
    %v1872 = vpack.c.b16 %v1777, %v1776
    %v1873 = vpack.c.b16 %v1779, %v1778
    %v1874 = vpack.c.b16 %v1781, %v1780
    %v1875 = vpack.c.b16 %v1783, %v1782
    %v1876 = vpack.c.b16 %v1785, %v1784
    %v1877 = vpack.c.b16 %v1787, %v1786
    %v1878 = vpack.c.b16 %v1789, %v1788
    %v1879 = vpack.c.b16 %v1791, %v1790
    %v1880 = vpack.c.b16 %v1793, %v1792
    %v1881 = vpack.c.b16 %v1795, %v1794
    %v1882 = vpack.c.b16 %v1797, %v1796
    %v1883 = vpack.c.b16 %v1799, %v1798
    %v1884 = vpack.c.b16 %v1801, %v1800
    %v1885 = vpack.c.b16 %v1803, %v1802
    %v1886 = vpack.c.b16 %v1805, %v1804
    %v1887 = vpack.c.b16 %v1807, %v1806
    %v1888 = vpack.c.b16 %v1809, %v1808
    %v1889 = vpack.c.b16 %v1811, %v1810
    %v1890 = vpack.c.b16 %v1813, %v1812
    %v1891 = vpack.c.b16 %v1815, %v1814
    %v1892 = vpack.c.b16 %v1817, %v1816
    %v1893 = vpack.c.b16 %v1819, %v1818
    %v1894 = vpack.c.b16 %v1821, %v1820
    %v1895 = vpack.c.b16 %v1823, %v1822
    %v1896 = vpack.c.b16 %v1825, %v1824
    %v1897 = vpack.c.b16 %v1827, %v1826
    %v1898 = vpack.c.b16 %v1829, %v1828
    %v1899 = vpack.c.b16 %v1831, %v1830
    %v1900 = vpack.c.b16 %v1833, %v1832
    %v1901 = vpack.c.b16 %v1835, %v1834
    %v1902 = vpack.c.b16 %v1837, %v1836
    %v1903 = vpack.c.b16 %v1839, %v1838
    %v1904 = vpack.c.b16 %v1841, %v1840
    %v1905 = vpack.c.b16 %v1843, %v1842
    %v1906 = vpack.c.b16 %v1845, %v1844
    %v1907 = vpack.c.b16 %v1847, %v1846
    %v1908 = vpack.c.b16 %v1849, %v1848
    %v1909 = vpack.c.b16 %v1851, %v1850
    %v1910 = vpack.c.b16 %v1853, %v1852
    %v1911 = vpack.c.b16 %v1855, %v1854
    %v1912 = vpack.c.b16 %v1857, %v1856
    %v1913 = vpack.c.b16 %v1859, %v1858
    %v1914 = vpack.c.b16 %v1861, %v1860
    %v1915 = vpack.c.b16 %v1863, %v1862
    %v1916 = vpack.c.b16 %v1865, %v1864
    %v1917 = vpack.c.b16 %v1867, %v1866
    %v1918 = vpack.c.b16 %v1869, %v1868
    %v1919 = vpack.c.b16 %v1871, %v1870
    %1968 = vmatprep.subr.bf16.mxu0 0
    %1969 = vmatpush1.bf16.msra.mxu0 %v1872
    %1970 = vmatprep.subr.bf16.mxu0 0
    %1971 = vmatpush1.bf16.msra.mxu0 %v1873
    %1972 = vmatprep.subr.bf16.mxu0 0
    %1973 = vmatpush1.bf16.msra.mxu0 %v1874
    %1974 = vmatprep.subr.bf16.mxu0 0
    %1975 = vmatpush1.bf16.msra.mxu0 %v1875
    %1976 = vmatprep.subr.bf16.mxu0 0
    %1977 = vmatpush1.bf16.msra.mxu0 %v1876
    %1978 = vmatprep.subr.bf16.mxu0 0
    %1979 = vmatpush1.bf16.msra.mxu0 %v1877
    %1980 = vmatprep.subr.bf16.mxu0 0
    %1981 = vmatpush1.bf16.msra.mxu0 %v1878
    %1982 = vmatprep.subr.bf16.mxu0 0
    %1983 = vmatpush1.bf16.msra.mxu0 %v1879
    %1984 = vmatprep.subr.bf16.mxu0 0
    %1985 = vmatpush1.bf16.msra.mxu0 %v1880
    %1986 = vmatprep.subr.bf16.mxu0 0
    %1987 = vmatpush1.bf16.msra.mxu0 %v1881
    %1988 = vmatprep.subr.bf16.mxu0 0
    %1989 = vmatpush1.bf16.msra.mxu0 %v1882
    %1990 = vmatprep.subr.bf16.mxu0 0
    %1991 = vmatpush1.bf16.msra.mxu0 %v1883
    %1992 = vmatprep.subr.bf16.mxu0 0
    %1993 = vmatpush1.bf16.msra.mxu0 %v1884
    %1994 = vmatprep.subr.bf16.mxu0 0
    %1995 = vmatpush1.bf16.msra.mxu0 %v1885
    %1996 = vmatprep.subr.bf16.mxu0 0
    %1997 = vmatpush1.bf16.msra.mxu0 %v1886
    %1998 = vmatprep.subr.bf16.mxu0 0
    %1999 = vmatpush1.bf16.msra.mxu0 %v1887
    %2000 = vmatprep.mubr.bf16.mxu0 %v1006
    %2001 = vmatmul.mubr.bf16.gmra.mrb[0].mxu0 %v1005
    %v2002 = vpop.f32.mrb[0].mxu0
    %v2003 = vadd.f32 %v1678, %v2002
    %v2004 = vpop.f32.mrb[0].mxu0
    %v2005 = vpop.f32.mrb[0].mxu0
    %v2006 = vpop.f32.mrb[0].mxu0
    %2007 = vdwg.mxu0
    %2008 = vmatprep.subr.bf16.mxu0 0
    %2009 = vmatpush1.bf16.msra.mxu0 %v1888
    %2010 = vmatprep.subr.bf16.mxu0 0
    %2011 = vmatpush1.bf16.msra.mxu0 %v1889
    %2012 = vmatprep.subr.bf16.mxu0 0
    %2013 = vmatpush1.bf16.msra.mxu0 %v1890
    %2014 = vmatprep.subr.bf16.mxu0 0
    %2015 = vmatpush1.bf16.msra.mxu0 %v1891
    %2016 = vmatprep.subr.bf16.mxu0 0
    %2017 = vmatpush1.bf16.msra.mxu0 %v1892
    %2018 = vmatprep.subr.bf16.mxu0 0
    %2019 = vmatpush1.bf16.msra.mxu0 %v1893
    %2020 = vmatprep.subr.bf16.mxu0 0
    %2021 = vmatpush1.bf16.msra.mxu0 %v1894
    %2022 = vmatprep.subr.bf16.mxu0 0
    %2023 = vmatpush1.bf16.msra.mxu0 %v1895
    %2024 = vmatprep.subr.bf16.mxu0 0
    %2025 = vmatpush1.bf16.msra.mxu0 %v1896
    %2026 = vmatprep.subr.bf16.mxu0 0
    %2027 = vmatpush1.bf16.msra.mxu0 %v1897
    %2028 = vmatprep.subr.bf16.mxu0 0
    %2029 = vmatpush1.bf16.msra.mxu0 %v1898
    %2030 = vmatprep.subr.bf16.mxu0 0
    %2031 = vmatpush1.bf16.msra.mxu0 %v1899
    %2032 = vmatprep.subr.bf16.mxu0 0
    %2033 = vmatpush1.bf16.msra.mxu0 %v1900
    %2034 = vmatprep.subr.bf16.mxu0 0
    %2035 = vmatpush1.bf16.msra.mxu0 %v1901
    %2036 = vmatprep.subr.bf16.mxu0 0
    %2037 = vmatpush1.bf16.msra.mxu0 %v1902
    %2038 = vmatprep.subr.bf16.mxu0 0
    %2039 = vmatpush1.bf16.msra.mxu0 %v1903
    %2040 = vmatprep.mubr.bf16.mxu0 %v1574
    %2041 = vmatmul.mubr.bf16.gmra.mrb[0].mxu0 %v1007
    %v2042 = vpop.f32.mrb[0].mxu0
    %v2043 = vadd.f32 %v2003, %v2042
    %v2044 = vpop.f32.mrb[0].mxu0
    %v2045 = vpop.f32.mrb[0].mxu0
    %v2046 = vpop.f32.mrb[0].mxu0
    %2047 = vdwg.mxu0
    %2048 = vmatprep.subr.bf16.mxu0 0
    %2049 = vmatpush1.bf16.msra.mxu0 %v1904
    %2050 = vmatprep.subr.bf16.mxu0 0
    %2051 = vmatpush1.bf16.msra.mxu0 %v1905
    %2052 = vmatprep.subr.bf16.mxu0 0
    %2053 = vmatpush1.bf16.msra.mxu0 %v1906
    %2054 = vmatprep.subr.bf16.mxu0 0
    %2055 = vmatpush1.bf16.msra.mxu0 %v1907
    %2056 = vmatprep.subr.bf16.mxu0 0
    %2057 = vmatpush1.bf16.msra.mxu0 %v1908
    %2058 = vmatprep.subr.bf16.mxu0 0
    %2059 = vmatpush1.bf16.msra.mxu0 %v1909
    %2060 = vmatprep.subr.bf16.mxu0 0
    %2061 = vmatpush1.bf16.msra.mxu0 %v1910
    %2062 = vmatprep.subr.bf16.mxu0 0
    %2063 = vmatpush1.bf16.msra.mxu0 %v1911
    %2064 = vmatprep.subr.bf16.mxu0 0
    %2065 = vmatpush1.bf16.msra.mxu0 %v1912
    %2066 = vmatprep.subr.bf16.mxu0 0
    %2067 = vmatpush1.bf16.msra.mxu0 %v1913
    %2068 = vmatprep.subr.bf16.mxu0 0
    %2069 = vmatpush1.bf16.msra.mxu0 %v1914
    %2070 = vmatprep.subr.bf16.mxu0 0
    %2071 = vmatpush1.bf16.msra.mxu0 %v1915
    %2072 = vmatprep.subr.bf16.mxu0 0
    %2073 = vmatpush1.bf16.msra.mxu0 %v1916
    %2074 = vmatprep.subr.bf16.mxu0 0
    %2075 = vmatpush1.bf16.msra.mxu0 %v1917
    %2076 = vmatprep.subr.bf16.mxu0 0
    %2077 = vmatpush1.bf16.msra.mxu0 %v1918
    %2078 = vmatprep.subr.bf16.mxu0 0
    %2079 = vmatpush1.bf16.msra.mxu0 %v1919
    %2080 = vmatprep.mubr.bf16.mxu0 %v1576
    %2081 = vmatmul.mubr.bf16.gmra.mrb[0].mxu0 %v1575
    %v2082 = vpop.f32.mrb[0].mxu0
    %v2083 = vadd.f32 %v2043, %v2082
    %v2084 = vpop.f32.mrb[0].mxu0
    %v2085 = vpop.f32.mrb[0].mxu0
    %v2086 = vpop.f32.mrb[0].mxu0
    %2087 = vdwg.mxu0
    %vm2088 = vcmask 64512
    %2089 = vst.msk [vmem:[%s8] sm:$0xff] %vm2088, %v2083
    // Predicated region
    $region46: #{_forward_impl.1} parent=1 // pred_check
      _
    $region47: #{_forward_impl.1} parent=1 // pred_check_branch
      %2091 = sbr.rel (0) target = $region49
    $region48: #{_forward_impl.1} parent=1 // pred_region
      _
    $region49: #{_forward_impl.1} parent=1 // pred_fallthru
      _
    // Predicated region
    $region50: #{_forward_impl.1} parent=1 // pred_check
      _
    $region51: #{_forward_impl.1} parent=1 // pred_check_branch
      %2093 = sbr.rel (0) target = $region53
    $region52: #{_forward_impl.1} parent=1 // pred_region
      _
    $region53: #{_forward_impl.1} parent=1 // pred_fallthru
      _
    %2094 = vsyncpa [#allocation3], 1
    %2095 = vsyncpa [#allocation5], 1

</llo_original>
